<compile_context>
chip_gen: v7x
topology: tpu7x:2x2x1
jax: 0.10.0
libtpu: 0.0.40
codegen_flags: <defaults>
</compile_context>

<pallas_src>
import math

import jax
import jax.numpy as jnp
from jax.experimental import pallas as pl
from jax.experimental.pallas import tpu as pltpu

LEAK = 0.2
LANE = 128          # TPU lane width
MAX_TILE_M = 512    # upper bound on batch rows per grid step

H1, H2 = 512, 256   # hidden widths (multiples of 128)
N_OUT = 1           # real output width
N_PAD = LANE        # lane-dense padded output width


def _round_up(x, m):
    return (x + m - 1) // m * m


def _pick_tile_m(batch):
    """Batch-adaptive tile: big enough to amortize per-step overhead and fill
    the 256-wide MXU, but keep >= 2 grid steps when possible (v7x has 2 TCs)."""
    b128 = _round_up(batch, LANE)
    if b128 <= LANE:
        return LANE
    half = max(LANE, (b128 // 2) // LANE * LANE)
    return min(MAX_TILE_M, half)


def _leaky_relu(x):
    return jnp.where(x >= 0, x, LEAK * x)


def discriminator_kernel(x_ref, w1_ref, b1_ref, w2_ref, b2_ref,
                         w3_ref, b3_ref, out_ref):
    # Linear(K, 512) + LeakyReLU(0.2). x arrives bf16 (cast fused into the
    # wrapper pad); f32 MXU accumulation; bias/elementwise in f32.
    h = jnp.dot(x_ref[...], w1_ref[...],
                preferred_element_type=jnp.float32) + b1_ref[...]
    h = _leaky_relu(h)

    # Linear(512, 256) + LeakyReLU(0.2)
    h = jnp.dot(h.astype(jnp.bfloat16), w2_ref[...],
                preferred_element_type=jnp.float32) + b2_ref[...]
    h = _leaky_relu(h)

    # Linear(256, 1); columns zero-padded to 128 -> unmasked lane-dense store.
    out = jnp.dot(h.astype(jnp.bfloat16), w3_ref[...],
                  preferred_element_type=jnp.float32) + b3_ref[...]
    out_ref[...] = out.astype(out_ref.dtype)


@jax.jit
def discriminator_forward(img, params):
    """img: (B, *img_shape) float -> validity (B, 1) float32."""
    B = img.shape[0]
    x = img.reshape(B, -1)                     # img.view(B, -1)
    K = x.shape[1]

    tile_m = _pick_tile_m(B)
    B_pad = _round_up(B, tile_m)
    grid = (B_pad // tile_m,)

    # Batch pad + bf16 cast in one fused producer (no K padding of x at all:
    # full-extent last-dim blocks are exempt from the 128-divisibility rule).
    x_p = jnp.pad(x, ((0, B_pad - B), (0, 0))).astype(jnp.bfloat16)

    # Weights bf16 (halves VMEM/DMA, feeds the bf16 MXU); biases stay f32.
    w1 = params["w1"].astype(jnp.bfloat16)                      # (K, 512)
    b1 = params["b1"].astype(jnp.float32)
    w2 = params["w2"].astype(jnp.bfloat16)                      # (512, 256)
    b2 = params["b2"].astype(jnp.float32)
    w3 = jnp.pad(params["w3"],
                 ((0, 0), (0, N_PAD - N_OUT))).astype(jnp.bfloat16)   # (256, 128)
    b3 = jnp.pad(params["b3"].astype(jnp.float32),
                 ((0, 0), (0, N_PAD - N_OUT)))                        # (1, 128)

    in_specs = [
        pl.BlockSpec((tile_m, K), lambda i: (i, 0)),   # x: batch-tiled
        pl.BlockSpec((K, H1), lambda i: (0, 0)),       # weights resident
        pl.BlockSpec((1, H1), lambda i: (0, 0)),
        pl.BlockSpec((H1, H2), lambda i: (0, 0)),
        pl.BlockSpec((1, H2), lambda i: (0, 0)),
        pl.BlockSpec((H2, N_PAD), lambda i: (0, 0)),
        pl.BlockSpec((1, N_PAD), lambda i: (0, 0)),
    ]
    out_specs = pl.BlockSpec((tile_m, N_PAD), lambda i: (i, 0))

    # VMEM budget: double-buffered x/out tiles + (conservatively
    # double-buffered) resident weights + f32 intermediates, 2x headroom,
    # clamped to [32 MiB, 64 MiB] (safe on v5e/v6e/v7x).
    w_bytes = (w1.size + w2.size + w3.size) * 2
    b_bytes = (b1.size + b2.size + b3.size) * 4
    est = (2 * tile_m * K * 2 + 2 * tile_m * N_PAD * 2
           + 2 * w_bytes + 2 * b_bytes + tile_m * (H1 + H2) * 4)
    vmem_limit = int(min(64 << 20, max(32 << 20, 2 * est)))

    flops = 2 * B_pad * (K * H1 + H1 * H2 + H2 * N_PAD)
    bytes_accessed = (x_p.size * 2 + w_bytes + b_bytes + B_pad * N_PAD * 2)

    out = pl.pallas_call(
        discriminator_kernel,
        out_shape=jax.ShapeDtypeStruct((B_pad, N_PAD), jnp.bfloat16),
        grid=grid,
        in_specs=in_specs,
        out_specs=out_specs,
        compiler_params=pltpu.CompilerParams(
            dimension_semantics=("parallel",),
            vmem_limit_bytes=vmem_limit),
        cost_estimate=pl.CostEstimate(
            flops=flops, transcendentals=0, bytes_accessed=bytes_accessed),
    )(x_p, w1, b1, w2, b2, w3, b3)

    # Strip batch + lane padding -> (B, 1) f32, exactly the module's output.
    return out[:B, :N_OUT].astype(jnp.float32)


def init_params(key, img_shape):
    """PyTorch-default Linear init: U(-1/sqrt(fan_in), 1/sqrt(fan_in))."""
    in_dim = int(math.prod(img_shape))
    dims = [(in_dim, H1), (H1, H2), (H2, N_OUT)]
    params = {}
    keys = jax.random.split(key, 2 * len(dims))
    for i, (fi, fo) in enumerate(dims):
        bound = 1.0 / math.sqrt(fi)
        params[f"w{i + 1}"] = jax.random.uniform(
            keys[2 * i], (fi, fo), jnp.float32, -bound, bound)
        params[f"b{i + 1}"] = jax.random.uniform(
            keys[2 * i + 1], (1, fo), jnp.float32, -bound, bound)
    return params


def _ref_forward(img, params):
    """Pure-JAX f32 reference of the PyTorch module."""
    x = img.reshape(img.shape[0], -1)
    h = x @ params["w1"] + params["b1"]
    h = jnp.where(h >= 0, h, LEAK * h)
    h = h @ params["w2"] + params["b2"]
    h = jnp.where(h >= 0, h, LEAK * h)
    return h @ params["w3"] + params["b3"]


if __name__ == "__main__":
    img_shape = (1, 16, 16)    # prod = 256
    batch = 200                # pads to 256 -> 2 grid steps of TILE_M=128

    key = jax.random.PRNGKey(0)
    pkey, xkey = jax.random.split(key)
    params = init_params(pkey, img_shape)
    img = jax.random.normal(xkey, (batch, *img_shape), jnp.float32)

    validity = discriminator_forward(img, params)
    validity = jax.block_until_ready(validity)

    assert validity.shape == (batch, 1), validity.shape
    assert bool(jnp.all(jnp.isfinite(validity)))

    # bf16 MXU operands + bf16 output store -> loose tolerance vs f32 ref.
    ref = _ref_forward(img, params)
    err = float(jnp.max(jnp.abs(validity - ref)))
    assert err < 0.1, f"max abs err {err}"

    print("KERNEL_OK")
</pallas_src>

<mosaic_0001>
module attributes {stable_mosaic.version = 11 : i64} {
  func.func @discriminator_kernel(%arg0: i32, %arg1: memref<128x256xbf16, #tpu.memory_space<vmem>>, %arg2: memref<256x512xbf16, #tpu.memory_space<vmem>>, %arg3: memref<1x512xf32, #tpu.memory_space<vmem>>, %arg4: memref<512x256xbf16, #tpu.memory_space<vmem>>, %arg5: memref<1x256xf32, #tpu.memory_space<vmem>>, %arg6: memref<256x128xbf16, #tpu.memory_space<vmem>>, %arg7: memref<1x128xf32, #tpu.memory_space<vmem>>, %arg8: memref<128x128xbf16, #tpu.memory_space<vmem>>) attributes {dimension_semantics = [#tpu.dimension_semantics<parallel>], iteration_bounds = array<i64: 2>, scalar_prefetch = 0 : i64, scratch_operands = 0 : i64, tpu.core_type = #tpu.core_type<tc>, window_params = [{transform_indices = @transform_0, window_bounds = array<i64: 128, 256>}, {pipeline_mode = #tpu.pipeline_mode<synchronous>, transform_indices = @transform_1, window_bounds = array<i64: 256, 512>}, {pipeline_mode = #tpu.pipeline_mode<synchronous>, transform_indices = @transform_2, window_bounds = array<i64: 1, 512>}, {pipeline_mode = #tpu.pipeline_mode<synchronous>, transform_indices = @transform_3, window_bounds = array<i64: 512, 256>}, {pipeline_mode = #tpu.pipeline_mode<synchronous>, transform_indices = @transform_4, window_bounds = array<i64: 1, 256>}, {pipeline_mode = #tpu.pipeline_mode<synchronous>, transform_indices = @transform_5, window_bounds = array<i64: 256, 128>}, {pipeline_mode = #tpu.pipeline_mode<synchronous>, transform_indices = @transform_6, window_bounds = array<i64: 1, 128>}, {transform_indices = @transform_7, window_bounds = array<i64: 128, 128>}]} {
    %c0 = arith.constant 0 : index
    %c0_0 = arith.constant 0 : index
    %0 = vector.load %arg1[%c0, %c0_0] : memref<128x256xbf16, #tpu.memory_space<vmem>>, vector<128x256xbf16>
    %c0_1 = arith.constant 0 : index
    %c0_2 = arith.constant 0 : index
    %1 = vector.load %arg2[%c0_1, %c0_2] : memref<256x512xbf16, #tpu.memory_space<vmem>>, vector<256x512xbf16>
    %cst = arith.constant dense<0.000000e+00> : vector<128x512xf32>
    %2 = tpu.matmul %0, %1, %cst {dimension_numbers = #tpu.dot_dimension_numbers<[1], [0], [0], [1], [0, 0, 1, 1], [], []>} : vector<128x256xbf16>, vector<256x512xbf16>, vector<128x512xf32> -> vector<128x512xf32>
    %c0_3 = arith.constant 0 : index
    %c0_4 = arith.constant 0 : index
    %3 = vector.load %arg3[%c0_3, %c0_4] : memref<1x512xf32, #tpu.memory_space<vmem>>, vector<1x512xf32>
    %4 = vector.broadcast %3 : vector<1x512xf32> to vector<128x512xf32>
    %5 = arith.addf %2, %4 : vector<128x512xf32>
    %cst_5 = arith.constant 0.000000e+00 : f32
    %6 = vector.broadcast %cst_5 : f32 to vector<128x512xf32>
    %7 = arith.cmpf oge, %5, %6 : vector<128x512xf32>
    %cst_6 = arith.constant 2.000000e-01 : f32
    %8 = vector.broadcast %cst_6 : f32 to vector<128x512xf32>
    %9 = arith.mulf %8, %5 : vector<128x512xf32>
    %10 = arith.select %7, %5, %9 : vector<128x512xi1>, vector<128x512xf32>
    %11 = arith.truncf %10 : vector<128x512xf32> to vector<128x512xbf16>
    %c0_7 = arith.constant 0 : index
    %c0_8 = arith.constant 0 : index
    %12 = vector.load %arg4[%c0_7, %c0_8] : memref<512x256xbf16, #tpu.memory_space<vmem>>, vector<512x256xbf16>
    %cst_9 = arith.constant dense<0.000000e+00> : vector<128x256xf32>
    %13 = tpu.matmul %11, %12, %cst_9 {dimension_numbers = #tpu.dot_dimension_numbers<[1], [0], [0], [1], [0, 0, 1, 1], [], []>} : vector<128x512xbf16>, vector<512x256xbf16>, vector<128x256xf32> -> vector<128x256xf32>
    %c0_10 = arith.constant 0 : index
    %c0_11 = arith.constant 0 : index
    %14 = vector.load %arg5[%c0_10, %c0_11] : memref<1x256xf32, #tpu.memory_space<vmem>>, vector<1x256xf32>
    %15 = vector.broadcast %14 : vector<1x256xf32> to vector<128x256xf32>
    %16 = arith.addf %13, %15 : vector<128x256xf32>
    %cst_12 = arith.constant 0.000000e+00 : f32
    %17 = vector.broadcast %cst_12 : f32 to vector<128x256xf32>
    %18 = arith.cmpf oge, %16, %17 : vector<128x256xf32>
    %cst_13 = arith.constant 2.000000e-01 : f32
    %19 = vector.broadcast %cst_13 : f32 to vector<128x256xf32>
    %20 = arith.mulf %19, %16 : vector<128x256xf32>
    %21 = arith.select %18, %16, %20 : vector<128x256xi1>, vector<128x256xf32>
    %22 = arith.truncf %21 : vector<128x256xf32> to vector<128x256xbf16>
    %c0_14 = arith.constant 0 : index
    %c0_15 = arith.constant 0 : index
    %23 = vector.load %arg6[%c0_14, %c0_15] : memref<256x128xbf16, #tpu.memory_space<vmem>>, vector<256x128xbf16>
    %cst_16 = arith.constant dense<0.000000e+00> : vector<128x128xf32>
    %24 = tpu.matmul %22, %23, %cst_16 {dimension_numbers = #tpu.dot_dimension_numbers<[1], [0], [0], [1], [0, 0, 1, 1], [], []>} : vector<128x256xbf16>, vector<256x128xbf16>, vector<128x128xf32> -> vector<128x128xf32>
    %c0_17 = arith.constant 0 : index
    %c0_18 = arith.constant 0 : index
    %25 = vector.load %arg7[%c0_17, %c0_18] : memref<1x128xf32, #tpu.memory_space<vmem>>, vector<1x128xf32>
    %26 = vector.broadcast %25 : vector<1x128xf32> to vector<128x128xf32>
    %27 = arith.addf %24, %26 : vector<128x128xf32>
    %28 = arith.truncf %27 : vector<128x128xf32> to vector<128x128xbf16>
    %c0_19 = arith.constant 0 : index
    %c0_20 = arith.constant 0 : index
    %29 = vector.load %arg8[%c0_19, %c0_20] : memref<128x128xbf16, #tpu.memory_space<vmem>>, vector<128x128xbf16>
    tpu.vector_store %arg8[%c0_19, %c0_20], %28 {strides = array<i32>} : memref<128x128xbf16, #tpu.memory_space<vmem>>, vector<128x128xbf16>,
    return
  }
  func.func @transform_0(%arg0: i32) -> (i32, i32) {
    %c0_i32 = arith.constant 0 : i32
    %c0_i32_0 = arith.constant 0 : i32
    return %arg0, %c0_i32 : i32, i32
  }
  func.func @transform_1(%arg0: i32) -> (i32, i32) {
    %c0_i32 = arith.constant 0 : i32
    %c0_i32_0 = arith.constant 0 : i32
    %c0_i32_1 = arith.constant 0 : i32
    return %c0_i32, %c0_i32_0 : i32, i32
  }
  func.func @transform_2(%arg0: i32) -> (i32, i32) {
    %c0_i32 = arith.constant 0 : i32
    %c0_i32_0 = arith.constant 0 : i32
    %c0_i32_1 = arith.constant 0 : i32
    return %c0_i32, %c0_i32_0 : i32, i32
  }
  func.func @transform_3(%arg0: i32) -> (i32, i32) {
    %c0_i32 = arith.constant 0 : i32
    %c0_i32_0 = arith.constant 0 : i32
    %c0_i32_1 = arith.constant 0 : i32
    return %c0_i32, %c0_i32_0 : i32, i32
  }
  func.func @transform_4(%arg0: i32) -> (i32, i32) {
    %c0_i32 = arith.constant 0 : i32
    %c0_i32_0 = arith.constant 0 : i32
    %c0_i32_1 = arith.constant 0 : i32
    return %c0_i32, %c0_i32_0 : i32, i32
  }
  func.func @transform_5(%arg0: i32) -> (i32, i32) {
    %c0_i32 = arith.constant 0 : i32
    %c0_i32_0 = arith.constant 0 : i32
    %c0_i32_1 = arith.constant 0 : i32
    return %c0_i32, %c0_i32_0 : i32, i32
  }
  func.func @transform_6(%arg0: i32) -> (i32, i32) {
    %c0_i32 = arith.constant 0 : i32
    %c0_i32_0 = arith.constant 0 : i32
    %c0_i32_1 = arith.constant 0 : i32
    return %c0_i32, %c0_i32_0 : i32, i32
  }
  func.func @transform_7(%arg0: i32) -> (i32, i32) {
    %c0_i32 = arith.constant 0 : i32
    %c0_i32_0 = arith.constant 0 : i32
    return %arg0, %c0_i32 : i32, i32
  }
}

</mosaic_0001>

<llo_original>
// kernel: discriminator_forward.1
$region0: #{discriminator_forward.1}
  #allocation0 [shape = 'u32[]', space=smem, size = 0x4, offset = 0x4, fixed_abs, tag = 'smem constant byte address 0x4 - core index']
  #allocation1 [shape = 'u32[144,128]{1,0:T(1,128)}', space=vmem, size = 0x12000, scoped, tag = 'internal scratch']
  %s0 = inlined_call_operand.vmem [shape: bf16[256,256], index: 0, kind: input, shape index: {}]
  %s1 = inlined_call_operand.vmem [shape: bf16[256,512], index: 1, kind: input, shape index: {}]
  %s2 = inlined_call_operand.vmem [shape: f32[1,512], index: 2, kind: input, shape index: {}]
  %s3 = inlined_call_operand.vmem [shape: bf16[512,256], index: 3, kind: input, shape index: {}]
  %s4 = inlined_call_operand.vmem [shape: f32[1,256], index: 4, kind: input, shape index: {}]
  %s5 = inlined_call_operand.vmem [shape: bf16[256,128], index: 5, kind: input, shape index: {}]
  %s6 = inlined_call_operand.vmem [shape: f32[1,128], index: 6, kind: input, shape index: {}]
  %s7 = inlined_call_operand.vmem [shape: bf16[256,128], index: 7, kind: output, shape index: {}]
  %s8 = sld [smem:[#allocation0]]
  $region61: #{discriminator_forward.1} parent=0
    _
  %s10 = ssub.s32 1, %s8
  %s11 = scalar_select 0, %s10, %s8
  loop: start=0, step=1, limit=4
  $region2: #{discriminator_forward.1} parent=0 // loop_pre_header
    _
  $region3: #{discriminator_forward.1} parent=0 // loop_header
    %s13 = sphi 0, %s17
    %p14 = scmp.ge.s32.totalorder %s13, 4
    %s23 = sphi 0, %s25
    %s26 = sphi 0, %s23
    %s27 = sphi 0, %s26
    %s43 = sphi 0, %s27
    %s47 = sphi 0, %s47
    %s49 = sphi 0, %s47
    %s50 = sphi 0, %s49
    %s64 = sphi 0, %s50
    %s68 = sphi 0, %s68
    %s70 = sphi 0, %s68
    %s71 = sphi 0, %s70
    %s85 = sphi 0, %s71
    %s89 = sphi 0, %s89
    %s91 = sphi 0, %s89
    %s92 = sphi 0, %s91
    %s106 = sphi 0, %s92
    %s110 = sphi 0, %s110
    %s112 = sphi 0, %s110
    %s113 = sphi 0, %s112
    %s127 = sphi 0, %s113
    %s131 = sphi 0, %s131
    %s133 = sphi 0, %s131
    %s134 = sphi 0, %s133
    %s148 = sphi 0, %s134
    %s152 = sphi 0, %s152
    %s154 = sphi 0, %s152
    %s155 = sphi 0, %s154
    %s169 = sphi 0, %s155
    %s175 = sphi 0, %s177
    %s178 = sphi 0, %s175
    %s179 = sphi 0, %s178
    %s195 = sphi 0, %s179
  $region4: #{discriminator_forward.1} parent=0 // loop_header_branch
    %16 = sbr.rel (%p14) target = $region8
  $region5: #{discriminator_forward.1} parent=0 // loop_body
    %s18 = ssub.s32 %s13, 1
    %s19 = ssub.s32 %s13, 2
    %s20 = sadd.s32 %s13, 1
    %s21 = ssub.s32 %s13, %s20
    %p22 = scmp.eq.s32.totalorder %s21, 0
    %s24 = sadd.s32 %s23, 1
    %s25 = scalar_select %p22, %s23, %s24
    %p28 = pneg %p22
    %p29 = scmp.eq.s32.totalorder %s13, 1
    %p30 = por %p28, %p29
    %p31 = scmp.ne.s32.totalorder %s23, %s26
    %p32 = scmp.eq.s32.totalorder %s13, 0
    %p33 = por %p31, %p32
    %p34 = scmp.ne.s32.totalorder %s23, %s26
    %p35 = scmp.eq.s32.totalorder %s18, 1
    %p36 = por %p34, %p35
    %p37 = scmp.ne.s32.totalorder %s26, %s27
    %p38 = scmp.eq.s32.totalorder %s18, 0
    %p39 = por %p37, %p38
    %p40 = scmp.ne.s32.totalorder %s26, %s27
    %p41 = scmp.eq.s32.totalorder %s19, 1
    %p42 = por %p40, %p41
    %p44 = scmp.ne.s32.totalorder %s27, %s43
    %p45 = scmp.eq.s32.totalorder %s19, 0
    %p46 = por %p44, %p45
    %s48 = sadd.s32 %s47, 1
    %p51 = scmp.eq.s32.totalorder %s13, 1
    %p52 = scmp.ne.s32.totalorder %s47, %s49
    %p53 = scmp.eq.s32.totalorder %s13, 0
    %p54 = por %p52, %p53
    %p55 = scmp.ne.s32.totalorder %s47, %s49
    %p56 = scmp.eq.s32.totalorder %s18, 1
    %p57 = por %p55, %p56
    %p58 = scmp.ne.s32.totalorder %s49, %s50
    %p59 = scmp.eq.s32.totalorder %s18, 0
    %p60 = por %p58, %p59
    %p61 = scmp.ne.s32.totalorder %s49, %s50
    %p62 = scmp.eq.s32.totalorder %s19, 1
    %p63 = por %p61, %p62
    %p65 = scmp.ne.s32.totalorder %s50, %s64
    %p66 = scmp.eq.s32.totalorder %s19, 0
    %p67 = por %p65, %p66
    %s69 = sadd.s32 %s68, 1
    %p72 = scmp.eq.s32.totalorder %s13, 1
    %p73 = scmp.ne.s32.totalorder %s68, %s70
    %p74 = scmp.eq.s32.totalorder %s13, 0
    %p75 = por %p73, %p74
    %p76 = scmp.ne.s32.totalorder %s68, %s70
    %p77 = scmp.eq.s32.totalorder %s18, 1
    %p78 = por %p76, %p77
    %p79 = scmp.ne.s32.totalorder %s70, %s71
    %p80 = scmp.eq.s32.totalorder %s18, 0
    %p81 = por %p79, %p80
    %p82 = scmp.ne.s32.totalorder %s70, %s71
    %p83 = scmp.eq.s32.totalorder %s19, 1
    %p84 = por %p82, %p83
    %p86 = scmp.ne.s32.totalorder %s71, %s85
    %p87 = scmp.eq.s32.totalorder %s19, 0
    %p88 = por %p86, %p87
    %s90 = sadd.s32 %s89, 1
    %p93 = scmp.eq.s32.totalorder %s13, 1
    %p94 = scmp.ne.s32.totalorder %s89, %s91
    %p95 = scmp.eq.s32.totalorder %s13, 0
    %p96 = por %p94, %p95
    %p97 = scmp.ne.s32.totalorder %s89, %s91
    %p98 = scmp.eq.s32.totalorder %s18, 1
    %p99 = por %p97, %p98
    %p100 = scmp.ne.s32.totalorder %s91, %s92
    %p101 = scmp.eq.s32.totalorder %s18, 0
    %p102 = por %p100, %p101
    %p103 = scmp.ne.s32.totalorder %s91, %s92
    %p104 = scmp.eq.s32.totalorder %s19, 1
    %p105 = por %p103, %p104
    %p107 = scmp.ne.s32.totalorder %s92, %s106
    %p108 = scmp.eq.s32.totalorder %s19, 0
    %p109 = por %p107, %p108
    %s111 = sadd.s32 %s110, 1
    %p114 = scmp.eq.s32.totalorder %s13, 1
    %p115 = scmp.ne.s32.totalorder %s110, %s112
    %p116 = scmp.eq.s32.totalorder %s13, 0
    %p117 = por %p115, %p116
    %p118 = scmp.ne.s32.totalorder %s110, %s112
    %p119 = scmp.eq.s32.totalorder %s18, 1
    %p120 = por %p118, %p119
    %p121 = scmp.ne.s32.totalorder %s112, %s113
    %p122 = scmp.eq.s32.totalorder %s18, 0
    %p123 = por %p121, %p122
    %p124 = scmp.ne.s32.totalorder %s112, %s113
    %p125 = scmp.eq.s32.totalorder %s19, 1
    %p126 = por %p124, %p125
    %p128 = scmp.ne.s32.totalorder %s113, %s127
    %p129 = scmp.eq.s32.totalorder %s19, 0
    %p130 = por %p128, %p129
    %s132 = sadd.s32 %s131, 1
    %p135 = scmp.eq.s32.totalorder %s13, 1
    %p136 = scmp.ne.s32.totalorder %s131, %s133
    %p137 = scmp.eq.s32.totalorder %s13, 0
    %p138 = por %p136, %p137
    %p139 = scmp.ne.s32.totalorder %s131, %s133
    %p140 = scmp.eq.s32.totalorder %s18, 1
    %p141 = por %p139, %p140
    %p142 = scmp.ne.s32.totalorder %s133, %s134
    %p143 = scmp.eq.s32.totalorder %s18, 0
    %p144 = por %p142, %p143
    %p145 = scmp.ne.s32.totalorder %s133, %s134
    %p146 = scmp.eq.s32.totalorder %s19, 1
    %p147 = por %p145, %p146
    %p149 = scmp.ne.s32.totalorder %s134, %s148
    %p150 = scmp.eq.s32.totalorder %s19, 0
    %p151 = por %p149, %p150
    %s153 = sadd.s32 %s152, 1
    %p156 = scmp.eq.s32.totalorder %s13, 1
    %p157 = scmp.ne.s32.totalorder %s152, %s154
    %p158 = scmp.eq.s32.totalorder %s13, 0
    %p159 = por %p157, %p158
    %p160 = scmp.ne.s32.totalorder %s152, %s154
    %p161 = scmp.eq.s32.totalorder %s18, 1
    %p162 = por %p160, %p161
    %p163 = scmp.ne.s32.totalorder %s154, %s155
    %p164 = scmp.eq.s32.totalorder %s18, 0
    %p165 = por %p163, %p164
    %p166 = scmp.ne.s32.totalorder %s154, %s155
    %p167 = scmp.eq.s32.totalorder %s19, 1
    %p168 = por %p166, %p167
    %p170 = scmp.ne.s32.totalorder %s155, %s169
    %p171 = scmp.eq.s32.totalorder %s19, 0
    %p172 = por %p170, %p171
    %s173 = ssub.s32 %s13, %s20
    %p174 = scmp.eq.s32.totalorder %s173, 0
    %s176 = sadd.s32 %s175, 1
    %s177 = scalar_select %p174, %s175, %s176
    %p180 = pneg %p174
    %p181 = scmp.eq.s32.totalorder %s13, 1
    %p182 = por %p180, %p181
    %p183 = scmp.ne.s32.totalorder %s175, %s178
    %p184 = scmp.eq.s32.totalorder %s13, 0
    %p185 = por %p183, %p184
    %p186 = scmp.ne.s32.totalorder %s175, %s178
    %p187 = scmp.eq.s32.totalorder %s18, 1
    %p188 = por %p186, %p187
    %p189 = scmp.ne.s32.totalorder %s178, %s179
    %p190 = scmp.eq.s32.totalorder %s18, 0
    %p191 = por %p189, %p190
    %p192 = scmp.ne.s32.totalorder %s178, %s179
    %p193 = scmp.eq.s32.totalorder %s19, 1
    %p194 = por %p192, %p193
    %p196 = scmp.ne.s32.totalorder %s179, %s195
    %p197 = scmp.eq.s32.totalorder %s19, 0
    %p198 = por %p196, %p197
    %p199 = scmp.le.s32.totalorder 1, %s13
    %p200 = scmp.lt.s32.totalorder %s13, 3
    %p201 = pnand %p199, %p200
    %p202 = pneg %p201
    // Predicated region
    $region9: #{discriminator_forward.1} parent=5 // pred_check
      _
    $region10: #{discriminator_forward.1} parent=5 // pred_check_branch
      %204 = sbr.rel (%p201) target = $region12
    $region11: #{discriminator_forward.1} parent=5 // pred_region
      %s205 = ssub.s32 %s13, 1
      // Predicated region
      $region13: #{discriminator_forward.1} parent=11 // pred_check
        %p206 = pneg %p60
      $region14: #{discriminator_forward.1} parent=11 // pred_check_branch
        %208 = sbr.rel (%p206) target = $region16
      $region15: #{discriminator_forward.1} parent=11 // pred_region
        _
      $region16: #{discriminator_forward.1} parent=11 // pred_fallthru
        _
      // Predicated region
      $region17: #{discriminator_forward.1} parent=11 // pred_check
        %p209 = pneg %p81
      $region18: #{discriminator_forward.1} parent=11 // pred_check_branch
        %211 = sbr.rel (%p209) target = $region20
      $region19: #{discriminator_forward.1} parent=11 // pred_region
        _
      $region20: #{discriminator_forward.1} parent=11 // pred_fallthru
        _
      // Predicated region
      $region21: #{discriminator_forward.1} parent=11 // pred_check
        %p212 = pneg %p102
      $region22: #{discriminator_forward.1} parent=11 // pred_check_branch
        %214 = sbr.rel (%p212) target = $region24
      $region23: #{discriminator_forward.1} parent=11 // pred_region
        _
      $region24: #{discriminator_forward.1} parent=11 // pred_fallthru
        _
      // Predicated region
      $region25: #{discriminator_forward.1} parent=11 // pred_check
        %p215 = pneg %p123
      $region26: #{discriminator_forward.1} parent=11 // pred_check_branch
        %217 = sbr.rel (%p215) target = $region28
      $region27: #{discriminator_forward.1} parent=11 // pred_region
        _
      $region28: #{discriminator_forward.1} parent=11 // pred_fallthru
        _
      // Predicated region
      $region29: #{discriminator_forward.1} parent=11 // pred_check
        %p218 = pneg %p144
      $region30: #{discriminator_forward.1} parent=11 // pred_check_branch
        %220 = sbr.rel (%p218) target = $region32
      $region31: #{discriminator_forward.1} parent=11 // pred_region
        _
      $region32: #{discriminator_forward.1} parent=11 // pred_fallthru
        _
      // Predicated region
      $region33: #{discriminator_forward.1} parent=11 // pred_check
        %p221 = pneg %p165
      $region34: #{discriminator_forward.1} parent=11 // pred_check_branch
        %223 = sbr.rel (%p221) target = $region36
      $region35: #{discriminator_forward.1} parent=11 // pred_region
        _
      $region36: #{discriminator_forward.1} parent=11 // pred_fallthru
        _
    $region12: #{discriminator_forward.1} parent=5 // pred_fallthru
      _
    %p224 = scmp.lt.s32.totalorder %s13, 2
    // Predicated region
    $region37: #{discriminator_forward.1} parent=5 // pred_check
      %p225 = pneg %p224
    $region38: #{discriminator_forward.1} parent=5 // pred_check_branch
      %227 = sbr.rel (%p225) target = $region40
    $region39: #{discriminator_forward.1} parent=5 // pred_region
      // Predicated region
      $region41: #{discriminator_forward.1} parent=39 // pred_check
        %p228 = pneg %p33
      $region42: #{discriminator_forward.1} parent=39 // pred_check_branch
        %230 = sbr.rel (%p228) target = $region44
      $region43: #{discriminator_forward.1} parent=39 // pred_region
        %s231 = smul.u32 16, %s13
        %p232 = scmp.lt.s32.totalorder %s231, 31
        %s233 = scalar_select %p232, %s231, 31
        %s234 = smul.addr %s233, 2
        %s235 = smul.addr %s234, 4
        %s236 = scalar_lea.vmem %s0, %s235
        %s237 = smul.u32 16, %s13
      $region44: #{discriminator_forward.1} parent=39 // pred_fallthru
        _
    $region40: #{discriminator_forward.1} parent=5 // pred_fallthru
      _
    %p238 = scmp.le.s32.totalorder 1, %s13
    %p239 = scmp.lt.s32.totalorder %s13, 3
    %p240 = pnand %p238, %p239
    %p241 = pneg %p240
    // Predicated region
    $region45: #{discriminator_forward.1} parent=5 // pred_check
      _
    $region46: #{discriminator_forward.1} parent=5 // pred_check_branch
      %243 = sbr.rel (%p240) target = $region48
    $region47: #{discriminator_forward.1} parent=5 // pred_region
      %s244 = ssub.s32 %s13, 1
      %s245 = smul.u32 16, %s18
      %p246 = scmp.lt.s32.totalorder %s245, 31
      %s247 = scalar_select %p246, %s245, 31
      %s248 = smul.addr %s247, 2
      %s249 = smul.addr %s248, 4
      %s250 = scalar_lea.vmem %s0, %s249
      %p251 = pneg %p39
      %p252 = pneg %p36
      %p253 = pneg %p60
      %p254 = pneg %p57
      %p255 = pneg %p81
      %p256 = pneg %p78
      %p257 = pneg %p102
      %p258 = pneg %p99
      %p259 = pneg %p123
      %p260 = pneg %p120
      %p261 = pneg %p144
      %p262 = pneg %p141
      %p263 = pneg %p165
      %p264 = pneg %p162
      %p265 = pneg %p191
      %p266 = pneg %p188
      %s267 = smul.u32 16, %s18
      %p268 = scmp.lt.s32.totalorder %s267, 31
      %s269 = scalar_select %p268, %s267, 31
      %s270 = smul.addr %s269, 4
      %s271 = scalar_lea.vmem %s7, %s270
      %s272 = smul.u32 16, %s18
      %p273 = scmp.lt.s32.totalorder %s272, 31
      %s274 = scalar_select %p273, %s272, 31
      %s275 = smul.addr %s274, 2
      %s276 = smul.addr %s275, 4
      %s277 = scalar_lea.vmem %s0, %s276
      %s278 = smul.u32 16, %s18
      %s279 = smul.u32 16, %s18
      %p280 = scmp.lt.s32.totalorder %s279, 31
      %s281 = scalar_select %p280, %s279, 31
      %s282 = smul.addr %s281, 4
      %s283 = scalar_lea.vmem %s7, %s282
      %s284 = smul.u32 16, %s18
      %v286 = vld [vmem:[%s277] sm:$0xff]
      %v287 = vld [vmem:[%s277 + $0x8] sm:$0xff]
      %v288 = vld [vmem:[%s277 + $0x10] sm:$0xff]
      %v289 = vld [vmem:[%s277 + $0x18] sm:$0xff]
      %v290 = vld [vmem:[%s277 + $0x20] sm:$0xff]
      %v291 = vld [vmem:[%s277 + $0x28] sm:$0xff]
      %v292 = vld [vmem:[%s277 + $0x30] sm:$0xff]
      %v293 = vld [vmem:[%s277 + $0x38] sm:$0xff]
      %v294 = vld [vmem:[%s277 + $0x40] sm:$0xff]
      %v295 = vld [vmem:[%s277 + $0x48] sm:$0xff]
      %v296 = vld [vmem:[%s277 + $0x50] sm:$0xff]
      %v297 = vld [vmem:[%s277 + $0x58] sm:$0xff]
      %v298 = vld [vmem:[%s277 + $0x60] sm:$0xff]
      %v299 = vld [vmem:[%s277 + $0x68] sm:$0xff]
      %v300 = vld [vmem:[%s277 + $0x70] sm:$0xff]
      %v301 = vld [vmem:[%s277 + $0x78] sm:$0xff]
      %v302 = vld [vmem:[%s1] sm:$0xff]
      %v303 = vld [vmem:[%s1 + $0x8] sm:$0xff]
      %v304 = vld [vmem:[%s1 + $0x10] sm:$0xff]
      %v305 = vld [vmem:[%s1 + $0x18] sm:$0xff]
      %v306 = vld [vmem:[%s1 + $0x20] sm:$0xff]
      %v307 = vld [vmem:[%s1 + $0x28] sm:$0xff]
      %v308 = vld [vmem:[%s1 + $0x30] sm:$0xff]
      %v309 = vld [vmem:[%s1 + $0x38] sm:$0xff]
      %v310 = vld [vmem:[%s1 + $0x40] sm:$0xff]
      %v311 = vld [vmem:[%s1 + $0x48] sm:$0xff]
      %v312 = vld [vmem:[%s1 + $0x50] sm:$0xff]
      %v313 = vld [vmem:[%s1 + $0x58] sm:$0xff]
      %v314 = vld [vmem:[%s1 + $0x60] sm:$0xff]
      %v315 = vld [vmem:[%s1 + $0x68] sm:$0xff]
      %v316 = vld [vmem:[%s1 + $0x70] sm:$0xff]
      %v317 = vld [vmem:[%s1 + $0x78] sm:$0xff]
      %v318 = vld [vmem:[%s1 + $0x80] sm:$0xff]
      %v319 = vld [vmem:[%s1 + $0x88] sm:$0xff]
      %v320 = vld [vmem:[%s1 + $0x90] sm:$0xff]
      %v321 = vld [vmem:[%s1 + $0x98] sm:$0xff]
      %v322 = vld [vmem:[%s1 + $0xa0] sm:$0xff]
      %v323 = vld [vmem:[%s1 + $0xa8] sm:$0xff]
      %v324 = vld [vmem:[%s1 + $0xb0] sm:$0xff]
      %v325 = vld [vmem:[%s1 + $0xb8] sm:$0xff]
      %v326 = vld [vmem:[%s1 + $0xc0] sm:$0xff]
      %v327 = vld [vmem:[%s1 + $0xc8] sm:$0xff]
      %v328 = vld [vmem:[%s1 + $0xd0] sm:$0xff]
      %v329 = vld [vmem:[%s1 + $0xd8] sm:$0xff]
      %v330 = vld [vmem:[%s1 + $0xe0] sm:$0xff]
      %v331 = vld [vmem:[%s1 + $0xe8] sm:$0xff]
      %v332 = vld [vmem:[%s1 + $0xf0] sm:$0xff]
      %v333 = vld [vmem:[%s1 + $0xf8] sm:$0xff]
      %v334 = vld [vmem:[%s1 + $0x100] sm:$0xff]
      %v335 = vld [vmem:[%s1 + $0x108] sm:$0xff]
      %v336 = vld [vmem:[%s1 + $0x110] sm:$0xff]
      %v337 = vld [vmem:[%s1 + $0x118] sm:$0xff]
      %v338 = vld [vmem:[%s1 + $0x120] sm:$0xff]
      %v339 = vld [vmem:[%s1 + $0x128] sm:$0xff]
      %v340 = vld [vmem:[%s1 + $0x130] sm:$0xff]
      %v341 = vld [vmem:[%s1 + $0x138] sm:$0xff]
      %v342 = vld [vmem:[%s1 + $0x140] sm:$0xff]
      %v343 = vld [vmem:[%s1 + $0x148] sm:$0xff]
      %v344 = vld [vmem:[%s1 + $0x150] sm:$0xff]
      %v345 = vld [vmem:[%s1 + $0x158] sm:$0xff]
      %v346 = vld [vmem:[%s1 + $0x160] sm:$0xff]
      %v347 = vld [vmem:[%s1 + $0x168] sm:$0xff]
      %v348 = vld [vmem:[%s1 + $0x170] sm:$0xff]
      %v349 = vld [vmem:[%s1 + $0x178] sm:$0xff]
      %v350 = vld [vmem:[%s1 + $0x180] sm:$0xff]
      %v351 = vld [vmem:[%s1 + $0x188] sm:$0xff]
      %v352 = vld [vmem:[%s1 + $0x190] sm:$0xff]
      %v353 = vld [vmem:[%s1 + $0x198] sm:$0xff]
      %v354 = vld [vmem:[%s1 + $0x1a0] sm:$0xff]
      %v355 = vld [vmem:[%s1 + $0x1a8] sm:$0xff]
      %v356 = vld [vmem:[%s1 + $0x1b0] sm:$0xff]
      %v357 = vld [vmem:[%s1 + $0x1b8] sm:$0xff]
      %v358 = vld [vmem:[%s1 + $0x1c0] sm:$0xff]
      %v359 = vld [vmem:[%s1 + $0x1c8] sm:$0xff]
      %v360 = vld [vmem:[%s1 + $0x1d0] sm:$0xff]
      %v361 = vld [vmem:[%s1 + $0x1d8] sm:$0xff]
      %v362 = vld [vmem:[%s1 + $0x1e0] sm:$0xff]
      %v363 = vld [vmem:[%s1 + $0x1e8] sm:$0xff]
      %v364 = vld [vmem:[%s1 + $0x1f0] sm:$0xff]
      %v365 = vld [vmem:[%s1 + $0x1f8] sm:$0xff]
      %v366 = vld [vmem:[%s2] sm:$0xf]
      %v368 = vlaneseq
      %v369 = vshrl.u32 %v368, 7
      %v370 = vsub.s32 0, %v369
      %v371 = vrot.slane %v366, %v370
      %v372 = vlaneseq
      %v373 = vshrl.u32 %v372, 7
      %v374 = vsub.s32 1, %v373
      %v375 = vrot.slane %v366, %v374
      %v376 = vlaneseq
      %v377 = vshrl.u32 %v376, 7
      %v378 = vsub.s32 2, %v377
      %v379 = vrot.slane %v366, %v378
      %v380 = vlaneseq
      %v381 = vshrl.u32 %v380, 7
      %v382 = vsub.s32 3, %v381
      %v383 = vrot.slane %v366, %v382
      %v404 = vunpack.c.l.b16 %v286
      %v405 = vunpack.c.h.b16 %v286
      %v406 = vunpack.c.l.b16 %v287
      %v407 = vunpack.c.h.b16 %v287
      %v408 = vunpack.c.l.b16 %v288
      %v409 = vunpack.c.h.b16 %v288
      %v410 = vunpack.c.l.b16 %v289
      %v411 = vunpack.c.h.b16 %v289
      %v412 = vunpack.c.l.b16 %v290
      %v413 = vunpack.c.h.b16 %v290
      %v414 = vunpack.c.l.b16 %v291
      %v415 = vunpack.c.h.b16 %v291
      %v416 = vunpack.c.l.b16 %v292
      %v417 = vunpack.c.h.b16 %v292
      %v418 = vunpack.c.l.b16 %v293
      %v419 = vunpack.c.h.b16 %v293
      %v420 = vunpack.c.l.b16 %v294
      %v421 = vunpack.c.h.b16 %v294
      %v422 = vunpack.c.l.b16 %v295
      %v423 = vunpack.c.h.b16 %v295
      %v424 = vunpack.c.l.b16 %v296
      %v425 = vunpack.c.h.b16 %v296
      %v426 = vunpack.c.l.b16 %v297
      %v427 = vunpack.c.h.b16 %v297
      %v428 = vunpack.c.l.b16 %v298
      %v429 = vunpack.c.h.b16 %v298
      %v430 = vunpack.c.l.b16 %v299
      %v431 = vunpack.c.h.b16 %v299
      %v432 = vunpack.c.l.b16 %v300
      %v433 = vunpack.c.h.b16 %v300
      %v434 = vunpack.c.l.b16 %v301
      %v435 = vunpack.c.h.b16 %v301
      %v436 = vpack.c.b16 %v406, %v404
      %v437 = vpack.c.b16 %v407, %v405
      %v438 = vpack.c.b16 %v410, %v408
      %v439 = vpack.c.b16 %v411, %v409
      %v440 = vpack.c.b16 %v414, %v412
      %v441 = vpack.c.b16 %v415, %v413
      %v442 = vpack.c.b16 %v418, %v416
      %v443 = vpack.c.b16 %v419, %v417
      %v444 = vpack.c.b16 %v422, %v420
      %v445 = vpack.c.b16 %v423, %v421
      %v446 = vpack.c.b16 %v426, %v424
      %v447 = vpack.c.b16 %v427, %v425
      %v448 = vpack.c.b16 %v430, %v428
      %v449 = vpack.c.b16 %v431, %v429
      %v450 = vpack.c.b16 %v434, %v432
      %v451 = vpack.c.b16 %v435, %v433
      %v532 = vunpack.c.l.b16 %v302
      %v533 = vunpack.c.h.b16 %v302
      %v534 = vunpack.c.l.b16 %v303
      %v535 = vunpack.c.h.b16 %v303
      %v536 = vunpack.c.l.b16 %v304
      %v537 = vunpack.c.h.b16 %v304
      %v538 = vunpack.c.l.b16 %v305
      %v539 = vunpack.c.h.b16 %v305
      %v540 = vunpack.c.l.b16 %v306
      %v541 = vunpack.c.h.b16 %v306
      %v542 = vunpack.c.l.b16 %v307
      %v543 = vunpack.c.h.b16 %v307
      %v544 = vunpack.c.l.b16 %v308
      %v545 = vunpack.c.h.b16 %v308
      %v546 = vunpack.c.l.b16 %v309
      %v547 = vunpack.c.h.b16 %v309
      %v548 = vunpack.c.l.b16 %v310
      %v549 = vunpack.c.h.b16 %v310
      %v550 = vunpack.c.l.b16 %v311
      %v551 = vunpack.c.h.b16 %v311
      %v552 = vunpack.c.l.b16 %v312
      %v553 = vunpack.c.h.b16 %v312
      %v554 = vunpack.c.l.b16 %v313
      %v555 = vunpack.c.h.b16 %v313
      %v556 = vunpack.c.l.b16 %v314
      %v557 = vunpack.c.h.b16 %v314
      %v558 = vunpack.c.l.b16 %v315
      %v559 = vunpack.c.h.b16 %v315
      %v560 = vunpack.c.l.b16 %v316
      %v561 = vunpack.c.h.b16 %v316
      %v562 = vunpack.c.l.b16 %v317
      %v563 = vunpack.c.h.b16 %v317
      %v564 = vunpack.c.l.b16 %v318
      %v565 = vunpack.c.h.b16 %v318
      %v566 = vunpack.c.l.b16 %v319
      %v567 = vunpack.c.h.b16 %v319
      %v568 = vunpack.c.l.b16 %v320
      %v569 = vunpack.c.h.b16 %v320
      %v570 = vunpack.c.l.b16 %v321
      %v571 = vunpack.c.h.b16 %v321
      %v572 = vunpack.c.l.b16 %v322
      %v573 = vunpack.c.h.b16 %v322
      %v574 = vunpack.c.l.b16 %v323
      %v575 = vunpack.c.h.b16 %v323
      %v576 = vunpack.c.l.b16 %v324
      %v577 = vunpack.c.h.b16 %v324
      %v578 = vunpack.c.l.b16 %v325
      %v579 = vunpack.c.h.b16 %v325
      %v580 = vunpack.c.l.b16 %v326
      %v581 = vunpack.c.h.b16 %v326
      %v582 = vunpack.c.l.b16 %v327
      %v583 = vunpack.c.h.b16 %v327
      %v584 = vunpack.c.l.b16 %v328
      %v585 = vunpack.c.h.b16 %v328
      %v586 = vunpack.c.l.b16 %v329
      %v587 = vunpack.c.h.b16 %v329
      %v588 = vunpack.c.l.b16 %v330
      %v589 = vunpack.c.h.b16 %v330
      %v590 = vunpack.c.l.b16 %v331
      %v591 = vunpack.c.h.b16 %v331
      %v592 = vunpack.c.l.b16 %v332
      %v593 = vunpack.c.h.b16 %v332
      %v594 = vunpack.c.l.b16 %v333
      %v595 = vunpack.c.h.b16 %v333
      %v596 = vunpack.c.l.b16 %v334
      %v597 = vunpack.c.h.b16 %v334
      %v598 = vunpack.c.l.b16 %v335
      %v599 = vunpack.c.h.b16 %v335
      %v600 = vunpack.c.l.b16 %v336
      %v601 = vunpack.c.h.b16 %v336
      %v602 = vunpack.c.l.b16 %v337
      %v603 = vunpack.c.h.b16 %v337
      %v604 = vunpack.c.l.b16 %v338
      %v605 = vunpack.c.h.b16 %v338
      %v606 = vunpack.c.l.b16 %v339
      %v607 = vunpack.c.h.b16 %v339
      %v608 = vunpack.c.l.b16 %v340
      %v609 = vunpack.c.h.b16 %v340
      %v610 = vunpack.c.l.b16 %v341
      %v611 = vunpack.c.h.b16 %v341
      %v612 = vunpack.c.l.b16 %v342
      %v613 = vunpack.c.h.b16 %v342
      %v614 = vunpack.c.l.b16 %v343
      %v615 = vunpack.c.h.b16 %v343
      %v616 = vunpack.c.l.b16 %v344
      %v617 = vunpack.c.h.b16 %v344
      %v618 = vunpack.c.l.b16 %v345
      %v619 = vunpack.c.h.b16 %v345
      %v620 = vunpack.c.l.b16 %v346
      %v621 = vunpack.c.h.b16 %v346
      %v622 = vunpack.c.l.b16 %v347
      %v623 = vunpack.c.h.b16 %v347
      %v624 = vunpack.c.l.b16 %v348
      %v625 = vunpack.c.h.b16 %v348
      %v626 = vunpack.c.l.b16 %v349
      %v627 = vunpack.c.h.b16 %v349
      %v628 = vunpack.c.l.b16 %v350
      %v629 = vunpack.c.h.b16 %v350
      %v630 = vunpack.c.l.b16 %v351
      %v631 = vunpack.c.h.b16 %v351
      %v632 = vunpack.c.l.b16 %v352
      %v633 = vunpack.c.h.b16 %v352
      %v634 = vunpack.c.l.b16 %v353
      %v635 = vunpack.c.h.b16 %v353
      %v636 = vunpack.c.l.b16 %v354
      %v637 = vunpack.c.h.b16 %v354
      %v638 = vunpack.c.l.b16 %v355
      %v639 = vunpack.c.h.b16 %v355
      %v640 = vunpack.c.l.b16 %v356
      %v641 = vunpack.c.h.b16 %v356
      %v642 = vunpack.c.l.b16 %v357
      %v643 = vunpack.c.h.b16 %v357
      %v644 = vunpack.c.l.b16 %v358
      %v645 = vunpack.c.h.b16 %v358
      %v646 = vunpack.c.l.b16 %v359
      %v647 = vunpack.c.h.b16 %v359
      %v648 = vunpack.c.l.b16 %v360
      %v649 = vunpack.c.h.b16 %v360
      %v650 = vunpack.c.l.b16 %v361
      %v651 = vunpack.c.h.b16 %v361
      %v652 = vunpack.c.l.b16 %v362
      %v653 = vunpack.c.h.b16 %v362
      %v654 = vunpack.c.l.b16 %v363
      %v655 = vunpack.c.h.b16 %v363
      %v656 = vunpack.c.l.b16 %v364
      %v657 = vunpack.c.h.b16 %v364
      %v658 = vunpack.c.l.b16 %v365
      %v659 = vunpack.c.h.b16 %v365
      %v660 = vpack.c.b16 %v536, %v532
      %v661 = vpack.c.b16 %v537, %v533
      %v662 = vpack.c.b16 %v538, %v534
      %v663 = vpack.c.b16 %v539, %v535
      %v664 = vpack.c.b16 %v544, %v540
      %v665 = vpack.c.b16 %v545, %v541
      %v666 = vpack.c.b16 %v546, %v542
      %v667 = vpack.c.b16 %v547, %v543
      %v668 = vpack.c.b16 %v552, %v548
      %v669 = vpack.c.b16 %v553, %v549
      %v670 = vpack.c.b16 %v554, %v550
      %v671 = vpack.c.b16 %v555, %v551
      %v672 = vpack.c.b16 %v560, %v556
      %v673 = vpack.c.b16 %v561, %v557
      %v674 = vpack.c.b16 %v562, %v558
      %v675 = vpack.c.b16 %v563, %v559
      %v676 = vpack.c.b16 %v568, %v564
      %v677 = vpack.c.b16 %v569, %v565
      %v678 = vpack.c.b16 %v570, %v566
      %v679 = vpack.c.b16 %v571, %v567
      %v680 = vpack.c.b16 %v576, %v572
      %v681 = vpack.c.b16 %v577, %v573
      %v682 = vpack.c.b16 %v578, %v574
      %v683 = vpack.c.b16 %v579, %v575
      %v684 = vpack.c.b16 %v584, %v580
      %v685 = vpack.c.b16 %v585, %v581
      %v686 = vpack.c.b16 %v586, %v582
      %v687 = vpack.c.b16 %v587, %v583
      %v688 = vpack.c.b16 %v592, %v588
      %v689 = vpack.c.b16 %v593, %v589
      %v690 = vpack.c.b16 %v594, %v590
      %v691 = vpack.c.b16 %v595, %v591
      %v692 = vpack.c.b16 %v600, %v596
      %v693 = vpack.c.b16 %v601, %v597
      %v694 = vpack.c.b16 %v602, %v598
      %v695 = vpack.c.b16 %v603, %v599
      %v696 = vpack.c.b16 %v608, %v604
      %v697 = vpack.c.b16 %v609, %v605
      %v698 = vpack.c.b16 %v610, %v606
      %v699 = vpack.c.b16 %v611, %v607
      %v700 = vpack.c.b16 %v616, %v612
      %v701 = vpack.c.b16 %v617, %v613
      %v702 = vpack.c.b16 %v618, %v614
      %v703 = vpack.c.b16 %v619, %v615
      %v704 = vpack.c.b16 %v624, %v620
      %v705 = vpack.c.b16 %v625, %v621
      %v706 = vpack.c.b16 %v626, %v622
      %v707 = vpack.c.b16 %v627, %v623
      %v708 = vpack.c.b16 %v632, %v628
      %v709 = vpack.c.b16 %v633, %v629
      %v710 = vpack.c.b16 %v634, %v630
      %v711 = vpack.c.b16 %v635, %v631
      %v712 = vpack.c.b16 %v640, %v636
      %v713 = vpack.c.b16 %v641, %v637
      %v714 = vpack.c.b16 %v642, %v638
      %v715 = vpack.c.b16 %v643, %v639
      %v716 = vpack.c.b16 %v648, %v644
      %v717 = vpack.c.b16 %v649, %v645
      %v718 = vpack.c.b16 %v650, %v646
      %v719 = vpack.c.b16 %v651, %v647
      %v720 = vpack.c.b16 %v656, %v652
      %v721 = vpack.c.b16 %v657, %v653
      %v722 = vpack.c.b16 %v658, %v654
      %v723 = vpack.c.b16 %v659, %v655
      %788 = vmatprep.subr.bf16.mxu0 %v661
      %789 = vmatpush1.bf16.msra.mxu0 %v660
      %790 = vmatprep.subr.bf16.mxu0 %v665
      %791 = vmatpush1.bf16.msra.mxu0 %v664
      %792 = vmatprep.subr.bf16.mxu0 %v669
      %793 = vmatpush1.bf16.msra.mxu0 %v668
      %794 = vmatprep.subr.bf16.mxu0 %v673
      %795 = vmatpush1.bf16.msra.mxu0 %v672
      %796 = vmatprep.subr.bf16.mxu0 %v677
      %797 = vmatpush1.bf16.msra.mxu0 %v676
      %798 = vmatprep.subr.bf16.mxu0 %v681
      %799 = vmatpush1.bf16.msra.mxu0 %v680
      %800 = vmatprep.subr.bf16.mxu0 %v685
      %801 = vmatpush1.bf16.msra.mxu0 %v684
      %802 = vmatprep.subr.bf16.mxu0 %v689
      %803 = vmatpush1.bf16.msra.mxu0 %v688
      %804 = vmatprep.subr.bf16.mxu0 %v693
      %805 = vmatpush1.bf16.msra.mxu0 %v692
      %806 = vmatprep.subr.bf16.mxu0 %v697
      %807 = vmatpush1.bf16.msra.mxu0 %v696
      %808 = vmatprep.subr.bf16.mxu0 %v701
      %809 = vmatpush1.bf16.msra.mxu0 %v700
      %810 = vmatprep.subr.bf16.mxu0 %v705
      %811 = vmatpush1.bf16.msra.mxu0 %v704
      %812 = vmatprep.subr.bf16.mxu0 %v709
      %813 = vmatpush1.bf16.msra.mxu0 %v708
      %814 = vmatprep.subr.bf16.mxu0 %v713
      %815 = vmatpush1.bf16.msra.mxu0 %v712
      %816 = vmatprep.subr.bf16.mxu0 %v717
      %817 = vmatpush1.bf16.msra.mxu0 %v716
      %818 = vmatprep.subr.bf16.mxu0 %v721
      %819 = vmatpush1.bf16.msra.mxu0 %v720
      %820 = vmatprep.mubr.bf16.mxu0 %v437
      %821 = vmatmul.mubr.bf16.gmra.mrb[0].mxu0 %v436
      %v822 = vpop.f32.mrb[0].mxu0
      %v823 = vadd.f32 %v371, %v822
      %v824 = vpop.f32.mrb[0].mxu0
      %v825 = vadd.f32 %v375, %v824
      %v826 = vpop.f32.mrb[0].mxu0
      %v827 = vadd.f32 %v371, %v826
      %v828 = vpop.f32.mrb[0].mxu0
      %v829 = vadd.f32 %v375, %v828
      %830 = vmatprep.mubr.bf16.mxu0 %v439
      %831 = vmatmul.mubr.bf16.gmra.mrb[0].mxu0 %v438
      %v832 = vpop.f32.mrb[0].mxu0
      %v833 = vadd.f32 %v371, %v832
      %v834 = vpop.f32.mrb[0].mxu0
      %v835 = vadd.f32 %v375, %v834
      %v836 = vpop.f32.mrb[0].mxu0
      %v837 = vadd.f32 %v371, %v836
      %v838 = vpop.f32.mrb[0].mxu0
      %v839 = vadd.f32 %v375, %v838
      %840 = vmatprep.mubr.bf16.mxu0 %v441
      %841 = vmatmul.mubr.bf16.gmra.mrb[0].mxu0 %v440
      %v842 = vpop.f32.mrb[0].mxu0
      %v843 = vadd.f32 %v371, %v842
      %v844 = vpop.f32.mrb[0].mxu0
      %v845 = vadd.f32 %v375, %v844
      %v846 = vpop.f32.mrb[0].mxu0
      %v847 = vadd.f32 %v371, %v846
      %v848 = vpop.f32.mrb[0].mxu0
      %v849 = vadd.f32 %v375, %v848
      %850 = vmatprep.mubr.bf16.mxu0 %v443
      %851 = vmatmul.mubr.bf16.gmra.mrb[0].mxu0 %v442
      %v852 = vpop.f32.mrb[0].mxu0
      %v853 = vadd.f32 %v371, %v852
      %v854 = vpop.f32.mrb[0].mxu0
      %v855 = vadd.f32 %v375, %v854
      %v856 = vpop.f32.mrb[0].mxu0
      %v857 = vadd.f32 %v371, %v856
      %v858 = vpop.f32.mrb[0].mxu0
      %v859 = vadd.f32 %v375, %v858
      %860 = vmatprep.mubr.bf16.mxu0 %v445
      %861 = vmatmul.mubr.bf16.gmra.mrb[0].mxu0 %v444
      %v862 = vpop.f32.mrb[0].mxu0
      %v863 = vadd.f32 %v371, %v862
      %v864 = vpop.f32.mrb[0].mxu0
      %v865 = vadd.f32 %v375, %v864
      %v866 = vpop.f32.mrb[0].mxu0
      %v867 = vadd.f32 %v371, %v866
      %v868 = vpop.f32.mrb[0].mxu0
      %v869 = vadd.f32 %v375, %v868
      %870 = vmatprep.mubr.bf16.mxu0 %v447
      %871 = vmatmul.mubr.bf16.gmra.mrb[0].mxu0 %v446
      %v872 = vpop.f32.mrb[0].mxu0
      %v873 = vadd.f32 %v371, %v872
      %v874 = vpop.f32.mrb[0].mxu0
      %v875 = vadd.f32 %v375, %v874
      %v876 = vpop.f32.mrb[0].mxu0
      %v877 = vadd.f32 %v371, %v876
      %v878 = vpop.f32.mrb[0].mxu0
      %v879 = vadd.f32 %v375, %v878
      %880 = vmatprep.mubr.bf16.mxu0 %v449
      %881 = vmatmul.mubr.bf16.gmra.mrb[0].mxu0 %v448
      %v882 = vpop.f32.mrb[0].mxu0
      %v883 = vadd.f32 %v371, %v882
      %v884 = vpop.f32.mrb[0].mxu0
      %v885 = vadd.f32 %v375, %v884
      %v886 = vpop.f32.mrb[0].mxu0
      %v887 = vadd.f32 %v371, %v886
      %v888 = vpop.f32.mrb[0].mxu0
      %v889 = vadd.f32 %v375, %v888
      %890 = vmatprep.mubr.bf16.mxu0 %v451
      %891 = vmatmul.mubr.bf16.gmra.mrb[0].mxu0 %v450
      %v892 = vpop.f32.mrb[0].mxu0
      %v893 = vadd.f32 %v371, %v892
      %v894 = vpop.f32.mrb[0].mxu0
      %v895 = vadd.f32 %v375, %v894
      %v896 = vpop.f32.mrb[0].mxu0
      %v897 = vadd.f32 %v371, %v896
      %v898 = vpop.f32.mrb[0].mxu0
      %v899 = vadd.f32 %v375, %v898
      %900 = vdwg.mxu0
      %901 = vmatprep.subr.bf16.mxu0 %v663
      %902 = vmatpush1.bf16.msra.mxu0 %v662
      %903 = vmatprep.subr.bf16.mxu0 %v667
      %904 = vmatpush1.bf16.msra.mxu0 %v666
      %905 = vmatprep.subr.bf16.mxu0 %v671
      %906 = vmatpush1.bf16.msra.mxu0 %v670
      %907 = vmatprep.subr.bf16.mxu0 %v675
      %908 = vmatpush1.bf16.msra.mxu0 %v674
      %909 = vmatprep.subr.bf16.mxu0 %v679
      %910 = vmatpush1.bf16.msra.mxu0 %v678
      %911 = vmatprep.subr.bf16.mxu0 %v683
      %912 = vmatpush1.bf16.msra.mxu0 %v682
      %913 = vmatprep.subr.bf16.mxu0 %v687
      %914 = vmatpush1.bf16.msra.mxu0 %v686
      %915 = vmatprep.subr.bf16.mxu0 %v691
      %916 = vmatpush1.bf16.msra.mxu0 %v690
      %917 = vmatprep.subr.bf16.mxu0 %v695
      %918 = vmatpush1.bf16.msra.mxu0 %v694
      %919 = vmatprep.subr.bf16.mxu0 %v699
      %920 = vmatpush1.bf16.msra.mxu0 %v698
      %921 = vmatprep.subr.bf16.mxu0 %v703
      %922 = vmatpush1.bf16.msra.mxu0 %v702
      %923 = vmatprep.subr.bf16.mxu0 %v707
      %924 = vmatpush1.bf16.msra.mxu0 %v706
      %925 = vmatprep.subr.bf16.mxu0 %v711
      %926 = vmatpush1.bf16.msra.mxu0 %v710
      %927 = vmatprep.subr.bf16.mxu0 %v715
      %928 = vmatpush1.bf16.msra.mxu0 %v714
      %929 = vmatprep.subr.bf16.mxu0 %v719
      %930 = vmatpush1.bf16.msra.mxu0 %v718
      %931 = vmatprep.subr.bf16.mxu0 %v723
      %932 = vmatpush1.bf16.msra.mxu0 %v722
      %933 = vmatprep.mubr.bf16.mxu0 %v437
      %934 = vmatmul.mubr.bf16.gmra.mrb[0].mxu0 %v436
      %v935 = vpop.f32.mrb[0].mxu0
      %v936 = vadd.f32 %v379, %v935
      %v937 = vpop.f32.mrb[0].mxu0
      %v938 = vadd.f32 %v383, %v937
      %v939 = vpop.f32.mrb[0].mxu0
      %v940 = vadd.f32 %v379, %v939
      %v941 = vpop.f32.mrb[0].mxu0
      %v942 = vadd.f32 %v383, %v941
      %943 = vmatprep.mubr.bf16.mxu0 %v439
      %944 = vmatmul.mubr.bf16.gmra.mrb[0].mxu0 %v438
      %v945 = vpop.f32.mrb[0].mxu0
      %v946 = vadd.f32 %v379, %v945
      %v947 = vpop.f32.mrb[0].mxu0
      %v948 = vadd.f32 %v383, %v947
      %v949 = vpop.f32.mrb[0].mxu0
      %v950 = vadd.f32 %v379, %v949
      %v951 = vpop.f32.mrb[0].mxu0
      %v952 = vadd.f32 %v383, %v951
      %953 = vmatprep.mubr.bf16.mxu0 %v441
      %954 = vmatmul.mubr.bf16.gmra.mrb[0].mxu0 %v440
      %v955 = vpop.f32.mrb[0].mxu0
      %v956 = vadd.f32 %v379, %v955
      %v957 = vpop.f32.mrb[0].mxu0
      %v958 = vadd.f32 %v383, %v957
      %v959 = vpop.f32.mrb[0].mxu0
      %v960 = vadd.f32 %v379, %v959
      %v961 = vpop.f32.mrb[0].mxu0
      %v962 = vadd.f32 %v383, %v961
      %963 = vmatprep.mubr.bf16.mxu0 %v443
      %964 = vmatmul.mubr.bf16.gmra.mrb[0].mxu0 %v442
      %v965 = vpop.f32.mrb[0].mxu0
      %v966 = vadd.f32 %v379, %v965
      %v967 = vpop.f32.mrb[0].mxu0
      %v968 = vadd.f32 %v383, %v967
      %v969 = vpop.f32.mrb[0].mxu0
      %v970 = vadd.f32 %v379, %v969
      %v971 = vpop.f32.mrb[0].mxu0
      %v972 = vadd.f32 %v383, %v971
      %973 = vmatprep.mubr.bf16.mxu0 %v445
      %974 = vmatmul.mubr.bf16.gmra.mrb[0].mxu0 %v444
      %v975 = vpop.f32.mrb[0].mxu0
      %v976 = vadd.f32 %v379, %v975
      %v977 = vpop.f32.mrb[0].mxu0
      %v978 = vadd.f32 %v383, %v977
      %v979 = vpop.f32.mrb[0].mxu0
      %v980 = vadd.f32 %v379, %v979
      %v981 = vpop.f32.mrb[0].mxu0
      %v982 = vadd.f32 %v383, %v981
      %983 = vmatprep.mubr.bf16.mxu0 %v447
      %984 = vmatmul.mubr.bf16.gmra.mrb[0].mxu0 %v446
      %v985 = vpop.f32.mrb[0].mxu0
      %v986 = vadd.f32 %v379, %v985
      %v987 = vpop.f32.mrb[0].mxu0
      %v988 = vadd.f32 %v383, %v987
      %v989 = vpop.f32.mrb[0].mxu0
      %v990 = vadd.f32 %v379, %v989
      %v991 = vpop.f32.mrb[0].mxu0
      %v992 = vadd.f32 %v383, %v991
      %993 = vmatprep.mubr.bf16.mxu0 %v449
      %994 = vmatmul.mubr.bf16.gmra.mrb[0].mxu0 %v448
      %v995 = vpop.f32.mrb[0].mxu0
      %v996 = vadd.f32 %v379, %v995
      %v997 = vpop.f32.mrb[0].mxu0
      %v998 = vadd.f32 %v383, %v997
      %v999 = vpop.f32.mrb[0].mxu0
      %v1000 = vadd.f32 %v379, %v999
      %v1001 = vpop.f32.mrb[0].mxu0
      %v1002 = vadd.f32 %v383, %v1001
      %1003 = vmatprep.mubr.bf16.mxu0 %v451
      %1004 = vmatmul.mubr.bf16.gmra.mrb[0].mxu0 %v450
      %v1005 = vpop.f32.mrb[0].mxu0
      %v1006 = vadd.f32 %v379, %v1005
      %v1007 = vpop.f32.mrb[0].mxu0
      %v1008 = vadd.f32 %v383, %v1007
      %v1009 = vpop.f32.mrb[0].mxu0
      %v1010 = vadd.f32 %v379, %v1009
      %v1011 = vpop.f32.mrb[0].mxu0
      %v1012 = vadd.f32 %v383, %v1011
      %1013 = vdwg.mxu0
      %vm1014 = vcmp.ge.f32.partialorder %v823, 0.0
      %vm1015 = vcmp.ge.f32.partialorder %v825, 0.0
      %vm1016 = vcmp.ge.f32.partialorder %v936, 0.0
      %vm1017 = vcmp.ge.f32.partialorder %v938, 0.0
      %vm1018 = vcmp.ge.f32.partialorder %v827, 0.0
      %vm1019 = vcmp.ge.f32.partialorder %v829, 0.0
      %vm1020 = vcmp.ge.f32.partialorder %v940, 0.0
      %vm1021 = vcmp.ge.f32.partialorder %v942, 0.0
      %vm1022 = vcmp.ge.f32.partialorder %v833, 0.0
      %vm1023 = vcmp.ge.f32.partialorder %v835, 0.0
      %vm1024 = vcmp.ge.f32.partialorder %v946, 0.0
      %vm1025 = vcmp.ge.f32.partialorder %v948, 0.0
      %vm1026 = vcmp.ge.f32.partialorder %v837, 0.0
      %vm1027 = vcmp.ge.f32.partialorder %v839, 0.0
      %vm1028 = vcmp.ge.f32.partialorder %v950, 0.0
      %vm1029 = vcmp.ge.f32.partialorder %v952, 0.0
      %vm1030 = vcmp.ge.f32.partialorder %v843, 0.0
      %vm1031 = vcmp.ge.f32.partialorder %v845, 0.0
      %vm1032 = vcmp.ge.f32.partialorder %v956, 0.0
      %vm1033 = vcmp.ge.f32.partialorder %v958, 0.0
      %vm1034 = vcmp.ge.f32.partialorder %v847, 0.0
      %vm1035 = vcmp.ge.f32.partialorder %v849, 0.0
      %vm1036 = vcmp.ge.f32.partialorder %v960, 0.0
      %vm1037 = vcmp.ge.f32.partialorder %v962, 0.0
      %vm1038 = vcmp.ge.f32.partialorder %v853, 0.0
      %vm1039 = vcmp.ge.f32.partialorder %v855, 0.0
      %vm1040 = vcmp.ge.f32.partialorder %v966, 0.0
      %vm1041 = vcmp.ge.f32.partialorder %v968, 0.0
      %vm1042 = vcmp.ge.f32.partialorder %v857, 0.0
      %vm1043 = vcmp.ge.f32.partialorder %v859, 0.0
      %vm1044 = vcmp.ge.f32.partialorder %v970, 0.0
      %vm1045 = vcmp.ge.f32.partialorder %v972, 0.0
      %vm1046 = vcmp.ge.f32.partialorder %v863, 0.0
      %vm1047 = vcmp.ge.f32.partialorder %v865, 0.0
      %vm1048 = vcmp.ge.f32.partialorder %v976, 0.0
      %vm1049 = vcmp.ge.f32.partialorder %v978, 0.0
      %vm1050 = vcmp.ge.f32.partialorder %v867, 0.0
      %vm1051 = vcmp.ge.f32.partialorder %v869, 0.0
      %vm1052 = vcmp.ge.f32.partialorder %v980, 0.0
      %vm1053 = vcmp.ge.f32.partialorder %v982, 0.0
      %vm1054 = vcmp.ge.f32.partialorder %v873, 0.0
      %vm1055 = vcmp.ge.f32.partialorder %v875, 0.0
      %vm1056 = vcmp.ge.f32.partialorder %v986, 0.0
      %vm1057 = vcmp.ge.f32.partialorder %v988, 0.0
      %vm1058 = vcmp.ge.f32.partialorder %v877, 0.0
      %vm1059 = vcmp.ge.f32.partialorder %v879, 0.0
      %vm1060 = vcmp.ge.f32.partialorder %v990, 0.0
      %vm1061 = vcmp.ge.f32.partialorder %v992, 0.0
      %vm1062 = vcmp.ge.f32.partialorder %v883, 0.0
      %vm1063 = vcmp.ge.f32.partialorder %v885, 0.0
      %vm1064 = vcmp.ge.f32.partialorder %v996, 0.0
      %vm1065 = vcmp.ge.f32.partialorder %v998, 0.0
      %vm1066 = vcmp.ge.f32.partialorder %v887, 0.0
      %vm1067 = vcmp.ge.f32.partialorder %v889, 0.0
      %vm1068 = vcmp.ge.f32.partialorder %v1000, 0.0
      %vm1069 = vcmp.ge.f32.partialorder %v1002, 0.0
      %vm1070 = vcmp.ge.f32.partialorder %v893, 0.0
      %vm1071 = vcmp.ge.f32.partialorder %v895, 0.0
      %vm1072 = vcmp.ge.f32.partialorder %v1006, 0.0
      %vm1073 = vcmp.ge.f32.partialorder %v1008, 0.0
      %vm1074 = vcmp.ge.f32.partialorder %v897, 0.0
      %vm1075 = vcmp.ge.f32.partialorder %v899, 0.0
      %vm1076 = vcmp.ge.f32.partialorder %v1010, 0.0
      %vm1077 = vcmp.ge.f32.partialorder %v1012, 0.0
      %v1078 = vmul.f32 %v823, 0.2
      %v1079 = vmul.f32 %v825, 0.2
      %v1080 = vmul.f32 %v936, 0.2
      %v1081 = vmul.f32 %v938, 0.2
      %v1082 = vmul.f32 %v827, 0.2
      %v1083 = vmul.f32 %v829, 0.2
      %v1084 = vmul.f32 %v940, 0.2
      %v1085 = vmul.f32 %v942, 0.2
      %v1086 = vmul.f32 %v833, 0.2
      %v1087 = vmul.f32 %v835, 0.2
      %v1088 = vmul.f32 %v946, 0.2
      %v1089 = vmul.f32 %v948, 0.2
      %v1090 = vmul.f32 %v837, 0.2
      %v1091 = vmul.f32 %v839, 0.2
      %v1092 = vmul.f32 %v950, 0.2
      %v1093 = vmul.f32 %v952, 0.2
      %v1094 = vmul.f32 %v843, 0.2
      %v1095 = vmul.f32 %v845, 0.2
      %v1096 = vmul.f32 %v956, 0.2
      %v1097 = vmul.f32 %v958, 0.2
      %v1098 = vmul.f32 %v847, 0.2
      %v1099 = vmul.f32 %v849, 0.2
      %v1100 = vmul.f32 %v960, 0.2
      %v1101 = vmul.f32 %v962, 0.2
      %v1102 = vmul.f32 %v853, 0.2
      %v1103 = vmul.f32 %v855, 0.2
      %v1104 = vmul.f32 %v966, 0.2
      %v1105 = vmul.f32 %v968, 0.2
      %v1106 = vmul.f32 %v857, 0.2
      %v1107 = vmul.f32 %v859, 0.2
      %v1108 = vmul.f32 %v970, 0.2
      %v1109 = vmul.f32 %v972, 0.2
      %v1110 = vmul.f32 %v863, 0.2
      %v1111 = vmul.f32 %v865, 0.2
      %v1112 = vmul.f32 %v976, 0.2
      %v1113 = vmul.f32 %v978, 0.2
      %v1114 = vmul.f32 %v867, 0.2
      %v1115 = vmul.f32 %v869, 0.2
      %v1116 = vmul.f32 %v980, 0.2
      %v1117 = vmul.f32 %v982, 0.2
      %v1118 = vmul.f32 %v873, 0.2
      %v1119 = vmul.f32 %v875, 0.2
      %v1120 = vmul.f32 %v986, 0.2
      %v1121 = vmul.f32 %v988, 0.2
      %v1122 = vmul.f32 %v877, 0.2
      %v1123 = vmul.f32 %v879, 0.2
      %v1124 = vmul.f32 %v990, 0.2
      %v1125 = vmul.f32 %v992, 0.2
      %v1126 = vmul.f32 %v883, 0.2
      %v1127 = vmul.f32 %v885, 0.2
      %v1128 = vmul.f32 %v996, 0.2
      %v1129 = vmul.f32 %v998, 0.2
      %v1130 = vmul.f32 %v887, 0.2
      %v1131 = vmul.f32 %v889, 0.2
      %v1132 = vmul.f32 %v1000, 0.2
      %v1133 = vmul.f32 %v1002, 0.2
      %v1134 = vmul.f32 %v893, 0.2
      %v1135 = vmul.f32 %v895, 0.2
      %v1136 = vmul.f32 %v1006, 0.2
      %v1137 = vmul.f32 %v1008, 0.2
      %v1138 = vmul.f32 %v897, 0.2
      %v1139 = vmul.f32 %v899, 0.2
      %v1140 = vmul.f32 %v1010, 0.2
      %v1141 = vmul.f32 %v1012, 0.2
      %v1142 = vsel %vm1014, %v823, %v1078
      %v1143 = vsel %vm1015, %v825, %v1079
      %v1144 = vsel %vm1016, %v936, %v1080
      %v1145 = vsel %vm1017, %v938, %v1081
      %v1146 = vsel %vm1018, %v827, %v1082
      %v1147 = vsel %vm1019, %v829, %v1083
      %v1148 = vsel %vm1020, %v940, %v1084
      %v1149 = vsel %vm1021, %v942, %v1085
      %v1150 = vsel %vm1022, %v833, %v1086
      %v1151 = vsel %vm1023, %v835, %v1087
      %v1152 = vsel %vm1024, %v946, %v1088
      %v1153 = vsel %vm1025, %v948, %v1089
      %v1154 = vsel %vm1026, %v837, %v1090
      %v1155 = vsel %vm1027, %v839, %v1091
      %v1156 = vsel %vm1028, %v950, %v1092
      %v1157 = vsel %vm1029, %v952, %v1093
      %v1158 = vsel %vm1030, %v843, %v1094
      %v1159 = vsel %vm1031, %v845, %v1095
      %v1160 = vsel %vm1032, %v956, %v1096
      %v1161 = vsel %vm1033, %v958, %v1097
      %v1162 = vsel %vm1034, %v847, %v1098
      %v1163 = vsel %vm1035, %v849, %v1099
      %v1164 = vsel %vm1036, %v960, %v1100
      %v1165 = vsel %vm1037, %v962, %v1101
      %v1166 = vsel %vm1038, %v853, %v1102
      %v1167 = vsel %vm1039, %v855, %v1103
      %v1168 = vsel %vm1040, %v966, %v1104
      %v1169 = vsel %vm1041, %v968, %v1105
      %v1170 = vsel %vm1042, %v857, %v1106
      %v1171 = vsel %vm1043, %v859, %v1107
      %v1172 = vsel %vm1044, %v970, %v1108
      %v1173 = vsel %vm1045, %v972, %v1109
      %v1174 = vsel %vm1046, %v863, %v1110
      %v1175 = vsel %vm1047, %v865, %v1111
      %v1176 = vsel %vm1048, %v976, %v1112
      %v1177 = vsel %vm1049, %v978, %v1113
      %v1178 = vsel %vm1050, %v867, %v1114
      %v1179 = vsel %vm1051, %v869, %v1115
      %v1180 = vsel %vm1052, %v980, %v1116
      %v1181 = vsel %vm1053, %v982, %v1117
      %v1182 = vsel %vm1054, %v873, %v1118
      %v1183 = vsel %vm1055, %v875, %v1119
      %v1184 = vsel %vm1056, %v986, %v1120
      %v1185 = vsel %vm1057, %v988, %v1121
      %v1186 = vsel %vm1058, %v877, %v1122
      %v1187 = vsel %vm1059, %v879, %v1123
      %v1188 = vsel %vm1060, %v990, %v1124
      %v1189 = vsel %vm1061, %v992, %v1125
      %v1190 = vsel %vm1062, %v883, %v1126
      %v1191 = vsel %vm1063, %v885, %v1127
      %v1192 = vsel %vm1064, %v996, %v1128
      %v1193 = vsel %vm1065, %v998, %v1129
      %v1194 = vsel %vm1066, %v887, %v1130
      %v1195 = vsel %vm1067, %v889, %v1131
      %v1196 = vsel %vm1068, %v1000, %v1132
      %v1197 = vsel %vm1069, %v1002, %v1133
      %v1198 = vsel %vm1070, %v893, %v1134
      %v1199 = vsel %vm1071, %v895, %v1135
      %v1200 = vsel %vm1072, %v1006, %v1136
      %v1201 = vsel %vm1073, %v1008, %v1137
      %v1202 = vsel %vm1074, %v897, %v1138
      %v1203 = vsel %vm1075, %v899, %v1139
      %v1204 = vsel %vm1076, %v1010, %v1140
      %v1205 = vsel %vm1077, %v1012, %v1141
      %v1206 = vpack.c.bf16 %v1146, %v1142
      %v1207 = vpack.c.bf16 %v1147, %v1143
      %v1208 = vpack.c.bf16 %v1148, %v1144
      %v1209 = vpack.c.bf16 %v1149, %v1145
      %v1210 = vpack.c.bf16 %v1154, %v1150
      %v1211 = vpack.c.bf16 %v1155, %v1151
      %v1212 = vpack.c.bf16 %v1156, %v1152
      %v1213 = vpack.c.bf16 %v1157, %v1153
      %v1214 = vpack.c.bf16 %v1162, %v1158
      %v1215 = vpack.c.bf16 %v1163, %v1159
      %v1216 = vpack.c.bf16 %v1164, %v1160
      %v1217 = vpack.c.bf16 %v1165, %v1161
      %v1218 = vpack.c.bf16 %v1170, %v1166
      %v1219 = vpack.c.bf16 %v1171, %v1167
      %v1220 = vpack.c.bf16 %v1172, %v1168
      %v1221 = vpack.c.bf16 %v1173, %v1169
      %v1222 = vpack.c.bf16 %v1178, %v1174
      %v1223 = vpack.c.bf16 %v1179, %v1175
      %v1224 = vpack.c.bf16 %v1180, %v1176
      %v1225 = vpack.c.bf16 %v1181, %v1177
      %v1226 = vpack.c.bf16 %v1186, %v1182
      %v1227 = vpack.c.bf16 %v1187, %v1183
      %v1228 = vpack.c.bf16 %v1188, %v1184
      %v1229 = vpack.c.bf16 %v1189, %v1185
      %v1230 = vpack.c.bf16 %v1194, %v1190
      %v1231 = vpack.c.bf16 %v1195, %v1191
      %v1232 = vpack.c.bf16 %v1196, %v1192
      %v1233 = vpack.c.bf16 %v1197, %v1193
      %v1234 = vpack.c.bf16 %v1202, %v1198
      %v1235 = vpack.c.bf16 %v1203, %v1199
      %v1236 = vpack.c.bf16 %v1204, %v1200
      %v1237 = vpack.c.bf16 %v1205, %v1201
      %v1238 = vld [vmem:[%s3] sm:$0xff]
      %v1239 = vld [vmem:[%s3 + $0x8] sm:$0xff]
      %v1240 = vld [vmem:[%s3 + $0x10] sm:$0xff]
      %v1241 = vld [vmem:[%s3 + $0x18] sm:$0xff]
      %v1242 = vld [vmem:[%s3 + $0x20] sm:$0xff]
      %v1243 = vld [vmem:[%s3 + $0x28] sm:$0xff]
      %v1244 = vld [vmem:[%s3 + $0x30] sm:$0xff]
      %v1245 = vld [vmem:[%s3 + $0x38] sm:$0xff]
      %v1246 = vld [vmem:[%s3 + $0x40] sm:$0xff]
      %v1247 = vld [vmem:[%s3 + $0x48] sm:$0xff]
      %v1248 = vld [vmem:[%s3 + $0x50] sm:$0xff]
      %v1249 = vld [vmem:[%s3 + $0x58] sm:$0xff]
      %v1250 = vld [vmem:[%s3 + $0x60] sm:$0xff]
      %v1251 = vld [vmem:[%s3 + $0x68] sm:$0xff]
      %v1252 = vld [vmem:[%s3 + $0x70] sm:$0xff]
      %v1253 = vld [vmem:[%s3 + $0x78] sm:$0xff]
      %v1254 = vld [vmem:[%s3 + $0x80] sm:$0xff]
      %v1255 = vld [vmem:[%s3 + $0x88] sm:$0xff]
      %v1256 = vld [vmem:[%s3 + $0x90] sm:$0xff]
      %v1257 = vld [vmem:[%s3 + $0x98] sm:$0xff]
      %v1258 = vld [vmem:[%s3 + $0xa0] sm:$0xff]
      %v1259 = vld [vmem:[%s3 + $0xa8] sm:$0xff]
      %v1260 = vld [vmem:[%s3 + $0xb0] sm:$0xff]
      %v1261 = vld [vmem:[%s3 + $0xb8] sm:$0xff]
      %v1262 = vld [vmem:[%s3 + $0xc0] sm:$0xff]
      %v1263 = vld [vmem:[%s3 + $0xc8] sm:$0xff]
      %v1264 = vld [vmem:[%s3 + $0xd0] sm:$0xff]
      %v1265 = vld [vmem:[%s3 + $0xd8] sm:$0xff]
      %v1266 = vld [vmem:[%s3 + $0xe0] sm:$0xff]
      %v1267 = vld [vmem:[%s3 + $0xe8] sm:$0xff]
      %v1268 = vld [vmem:[%s3 + $0xf0] sm:$0xff]
      %v1269 = vld [vmem:[%s3 + $0xf8] sm:$0xff]
      %v1270 = vld [vmem:[%s3 + $0x100] sm:$0xff]
      %v1271 = vld [vmem:[%s3 + $0x108] sm:$0xff]
      %v1272 = vld [vmem:[%s3 + $0x110] sm:$0xff]
      %v1273 = vld [vmem:[%s3 + $0x118] sm:$0xff]
      %v1274 = vld [vmem:[%s3 + $0x120] sm:$0xff]
      %v1275 = vld [vmem:[%s3 + $0x128] sm:$0xff]
      %v1276 = vld [vmem:[%s3 + $0x130] sm:$0xff]
      %v1277 = vld [vmem:[%s3 + $0x138] sm:$0xff]
      %v1278 = vld [vmem:[%s3 + $0x140] sm:$0xff]
      %v1279 = vld [vmem:[%s3 + $0x148] sm:$0xff]
      %v1280 = vld [vmem:[%s3 + $0x150] sm:$0xff]
      %v1281 = vld [vmem:[%s3 + $0x158] sm:$0xff]
      %v1282 = vld [vmem:[%s3 + $0x160] sm:$0xff]
      %v1283 = vld [vmem:[%s3 + $0x168] sm:$0xff]
      %v1284 = vld [vmem:[%s3 + $0x170] sm:$0xff]
      %v1285 = vld [vmem:[%s3 + $0x178] sm:$0xff]
      %v1286 = vld [vmem:[%s3 + $0x180] sm:$0xff]
      %v1287 = vld [vmem:[%s3 + $0x188] sm:$0xff]
      %v1288 = vld [vmem:[%s3 + $0x190] sm:$0xff]
      %v1289 = vld [vmem:[%s3 + $0x198] sm:$0xff]
      %v1290 = vld [vmem:[%s3 + $0x1a0] sm:$0xff]
      %v1291 = vld [vmem:[%s3 + $0x1a8] sm:$0xff]
      %v1292 = vld [vmem:[%s3 + $0x1b0] sm:$0xff]
      %v1293 = vld [vmem:[%s3 + $0x1b8] sm:$0xff]
      %v1294 = vld [vmem:[%s3 + $0x1c0] sm:$0xff]
      %v1295 = vld [vmem:[%s3 + $0x1c8] sm:$0xff]
      %v1296 = vld [vmem:[%s3 + $0x1d0] sm:$0xff]
      %v1297 = vld [vmem:[%s3 + $0x1d8] sm:$0xff]
      %v1298 = vld [vmem:[%s3 + $0x1e0] sm:$0xff]
      %v1299 = vld [vmem:[%s3 + $0x1e8] sm:$0xff]
      %v1300 = vld [vmem:[%s3 + $0x1f0] sm:$0xff]
      %v1301 = vld [vmem:[%s3 + $0x1f8] sm:$0xff]
      %v1302 = vld [vmem:[%s4] sm:$0x3]
      %v1304 = vlaneseq
      %v1305 = vshrl.u32 %v1304, 7
      %v1306 = vsub.s32 0, %v1305
      %v1307 = vrot.slane %v1302, %v1306
      %v1308 = vlaneseq
      %v1309 = vshrl.u32 %v1308, 7
      %v1310 = vsub.s32 1, %v1309
      %v1311 = vrot.slane %v1302, %v1310
      %v1378 = vunpack.c.l.b16 %v1238
      %v1379 = vunpack.c.h.b16 %v1238
      %v1380 = vunpack.c.l.b16 %v1239
      %v1381 = vunpack.c.h.b16 %v1239
      %v1382 = vunpack.c.l.b16 %v1240
      %v1383 = vunpack.c.h.b16 %v1240
      %v1384 = vunpack.c.l.b16 %v1241
      %v1385 = vunpack.c.h.b16 %v1241
      %v1386 = vunpack.c.l.b16 %v1242
      %v1387 = vunpack.c.h.b16 %v1242
      %v1388 = vunpack.c.l.b16 %v1243
      %v1389 = vunpack.c.h.b16 %v1243
      %v1390 = vunpack.c.l.b16 %v1244
      %v1391 = vunpack.c.h.b16 %v1244
      %v1392 = vunpack.c.l.b16 %v1245
      %v1393 = vunpack.c.h.b16 %v1245
      %v1394 = vunpack.c.l.b16 %v1246
      %v1395 = vunpack.c.h.b16 %v1246
      %v1396 = vunpack.c.l.b16 %v1247
      %v1397 = vunpack.c.h.b16 %v1247
      %v1398 = vunpack.c.l.b16 %v1248
      %v1399 = vunpack.c.h.b16 %v1248
      %v1400 = vunpack.c.l.b16 %v1249
      %v1401 = vunpack.c.h.b16 %v1249
      %v1402 = vunpack.c.l.b16 %v1250
      %v1403 = vunpack.c.h.b16 %v1250
      %v1404 = vunpack.c.l.b16 %v1251
      %v1405 = vunpack.c.h.b16 %v1251
      %v1406 = vunpack.c.l.b16 %v1252
      %v1407 = vunpack.c.h.b16 %v1252
      %v1408 = vunpack.c.l.b16 %v1253
      %v1409 = vunpack.c.h.b16 %v1253
      %v1410 = vunpack.c.l.b16 %v1254
      %v1411 = vunpack.c.h.b16 %v1254
      %v1412 = vunpack.c.l.b16 %v1255
      %v1413 = vunpack.c.h.b16 %v1255
      %v1414 = vunpack.c.l.b16 %v1256
      %v1415 = vunpack.c.h.b16 %v1256
      %v1416 = vunpack.c.l.b16 %v1257
      %v1417 = vunpack.c.h.b16 %v1257
      %v1418 = vunpack.c.l.b16 %v1258
      %v1419 = vunpack.c.h.b16 %v1258
      %v1420 = vunpack.c.l.b16 %v1259
      %v1421 = vunpack.c.h.b16 %v1259
      %v1422 = vunpack.c.l.b16 %v1260
      %v1423 = vunpack.c.h.b16 %v1260
      %v1424 = vunpack.c.l.b16 %v1261
      %v1425 = vunpack.c.h.b16 %v1261
      %v1426 = vunpack.c.l.b16 %v1262
      %v1427 = vunpack.c.h.b16 %v1262
      %v1428 = vunpack.c.l.b16 %v1263
      %v1429 = vunpack.c.h.b16 %v1263
      %v1430 = vunpack.c.l.b16 %v1264
      %v1431 = vunpack.c.h.b16 %v1264
      %v1432 = vunpack.c.l.b16 %v1265
      %v1433 = vunpack.c.h.b16 %v1265
      %v1434 = vunpack.c.l.b16 %v1266
      %v1435 = vunpack.c.h.b16 %v1266
      %v1436 = vunpack.c.l.b16 %v1267
      %v1437 = vunpack.c.h.b16 %v1267
      %v1438 = vunpack.c.l.b16 %v1268
      %v1439 = vunpack.c.h.b16 %v1268
      %v1440 = vunpack.c.l.b16 %v1269
      %v1441 = vunpack.c.h.b16 %v1269
      %v1442 = vunpack.c.l.b16 %v1270
      %v1443 = vunpack.c.h.b16 %v1270
      %v1444 = vunpack.c.l.b16 %v1271
      %v1445 = vunpack.c.h.b16 %v1271
      %v1446 = vunpack.c.l.b16 %v1272
      %v1447 = vunpack.c.h.b16 %v1272
      %v1448 = vunpack.c.l.b16 %v1273
      %v1449 = vunpack.c.h.b16 %v1273
      %v1450 = vunpack.c.l.b16 %v1274
      %v1451 = vunpack.c.h.b16 %v1274
      %v1452 = vunpack.c.l.b16 %v1275
      %v1453 = vunpack.c.h.b16 %v1275
      %v1454 = vunpack.c.l.b16 %v1276
      %v1455 = vunpack.c.h.b16 %v1276
      %v1456 = vunpack.c.l.b16 %v1277
      %v1457 = vunpack.c.h.b16 %v1277
      %v1458 = vunpack.c.l.b16 %v1278
      %v1459 = vunpack.c.h.b16 %v1278
      %v1460 = vunpack.c.l.b16 %v1279
      %v1461 = vunpack.c.h.b16 %v1279
      %v1462 = vunpack.c.l.b16 %v1280
      %v1463 = vunpack.c.h.b16 %v1280
      %v1464 = vunpack.c.l.b16 %v1281
      %v1465 = vunpack.c.h.b16 %v1281
      %v1466 = vunpack.c.l.b16 %v1282
      %v1467 = vunpack.c.h.b16 %v1282
      %v1468 = vunpack.c.l.b16 %v1283
      %v1469 = vunpack.c.h.b16 %v1283
      %v1470 = vunpack.c.l.b16 %v1284
      %v1471 = vunpack.c.h.b16 %v1284
      %v1472 = vunpack.c.l.b16 %v1285
      %v1473 = vunpack.c.h.b16 %v1285
      %v1474 = vunpack.c.l.b16 %v1286
      %v1475 = vunpack.c.h.b16 %v1286
      %v1476 = vunpack.c.l.b16 %v1287
      %v1477 = vunpack.c.h.b16 %v1287
      %v1478 = vunpack.c.l.b16 %v1288
      %v1479 = vunpack.c.h.b16 %v1288
      %v1480 = vunpack.c.l.b16 %v1289
      %v1481 = vunpack.c.h.b16 %v1289
      %v1482 = vunpack.c.l.b16 %v1290
      %v1483 = vunpack.c.h.b16 %v1290
      %v1484 = vunpack.c.l.b16 %v1291
      %v1485 = vunpack.c.h.b16 %v1291
      %v1486 = vunpack.c.l.b16 %v1292
      %v1487 = vunpack.c.h.b16 %v1292
      %v1488 = vunpack.c.l.b16 %v1293
      %v1489 = vunpack.c.h.b16 %v1293
      %v1490 = vunpack.c.l.b16 %v1294
      %v1491 = vunpack.c.h.b16 %v1294
      %v1492 = vunpack.c.l.b16 %v1295
      %v1493 = vunpack.c.h.b16 %v1295
      %v1494 = vunpack.c.l.b16 %v1296
      %v1495 = vunpack.c.h.b16 %v1296
      %v1496 = vunpack.c.l.b16 %v1297
      %v1497 = vunpack.c.h.b16 %v1297
      %v1498 = vunpack.c.l.b16 %v1298
      %v1499 = vunpack.c.h.b16 %v1298
      %v1500 = vunpack.c.l.b16 %v1299
      %v1501 = vunpack.c.h.b16 %v1299
      %v1502 = vunpack.c.l.b16 %v1300
      %v1503 = vunpack.c.h.b16 %v1300
      %v1504 = vunpack.c.l.b16 %v1301
      %v1505 = vunpack.c.h.b16 %v1301
      %v1506 = vpack.c.b16 %v1380, %v1378
      %v1507 = vpack.c.b16 %v1381, %v1379
      %v1508 = vpack.c.b16 %v1384, %v1382
      %v1509 = vpack.c.b16 %v1385, %v1383
      %v1510 = vpack.c.b16 %v1388, %v1386
      %v1511 = vpack.c.b16 %v1389, %v1387
      %v1512 = vpack.c.b16 %v1392, %v1390
      %v1513 = vpack.c.b16 %v1393, %v1391
      %v1514 = vpack.c.b16 %v1396, %v1394
      %v1515 = vpack.c.b16 %v1397, %v1395
      %v1516 = vpack.c.b16 %v1400, %v1398
      %v1517 = vpack.c.b16 %v1401, %v1399
      %v1518 = vpack.c.b16 %v1404, %v1402
      %v1519 = vpack.c.b16 %v1405, %v1403
      %v1520 = vpack.c.b16 %v1408, %v1406
      %v1521 = vpack.c.b16 %v1409, %v1407
      %v1522 = vpack.c.b16 %v1412, %v1410
      %v1523 = vpack.c.b16 %v1413, %v1411
      %v1524 = vpack.c.b16 %v1416, %v1414
      %v1525 = vpack.c.b16 %v1417, %v1415
      %v1526 = vpack.c.b16 %v1420, %v1418
      %v1527 = vpack.c.b16 %v1421, %v1419
      %v1528 = vpack.c.b16 %v1424, %v1422
      %v1529 = vpack.c.b16 %v1425, %v1423
      %v1530 = vpack.c.b16 %v1428, %v1426
      %v1531 = vpack.c.b16 %v1429, %v1427
      %v1532 = vpack.c.b16 %v1432, %v1430
      %v1533 = vpack.c.b16 %v1433, %v1431
      %v1534 = vpack.c.b16 %v1436, %v1434
      %v1535 = vpack.c.b16 %v1437, %v1435
      %v1536 = vpack.c.b16 %v1440, %v1438
      %v1537 = vpack.c.b16 %v1441, %v1439
      %v1538 = vpack.c.b16 %v1444, %v1442
      %v1539 = vpack.c.b16 %v1445, %v1443
      %v1540 = vpack.c.b16 %v1448, %v1446
      %v1541 = vpack.c.b16 %v1449, %v1447
      %v1542 = vpack.c.b16 %v1452, %v1450
      %v1543 = vpack.c.b16 %v1453, %v1451
      %v1544 = vpack.c.b16 %v1456, %v1454
      %v1545 = vpack.c.b16 %v1457, %v1455
      %v1546 = vpack.c.b16 %v1460, %v1458
      %v1547 = vpack.c.b16 %v1461, %v1459
      %v1548 = vpack.c.b16 %v1464, %v1462
      %v1549 = vpack.c.b16 %v1465, %v1463
      %v1550 = vpack.c.b16 %v1468, %v1466
      %v1551 = vpack.c.b16 %v1469, %v1467
      %v1552 = vpack.c.b16 %v1472, %v1470
      %v1553 = vpack.c.b16 %v1473, %v1471
      %v1554 = vpack.c.b16 %v1476, %v1474
      %v1555 = vpack.c.b16 %v1477, %v1475
      %v1556 = vpack.c.b16 %v1480, %v1478
      %v1557 = vpack.c.b16 %v1481, %v1479
      %v1558 = vpack.c.b16 %v1484, %v1482
      %v1559 = vpack.c.b16 %v1485, %v1483
      %v1560 = vpack.c.b16 %v1488, %v1486
      %v1561 = vpack.c.b16 %v1489, %v1487
      %v1562 = vpack.c.b16 %v1492, %v1490
      %v1563 = vpack.c.b16 %v1493, %v1491
      %v1564 = vpack.c.b16 %v1496, %v1494
      %v1565 = vpack.c.b16 %v1497, %v1495
      %v1566 = vpack.c.b16 %v1500, %v1498
      %v1567 = vpack.c.b16 %v1501, %v1499
      %v1568 = vpack.c.b16 %v1504, %v1502
      %v1569 = vpack.c.b16 %v1505, %v1503
      %1634 = vmatprep.subr.bf16.mxu0 %v1507
      %1635 = vmatpush1.bf16.msra.mxu0 %v1506
      %1636 = vmatprep.subr.bf16.mxu0 %v1509
      %1637 = vmatpush1.bf16.msra.mxu0 %v1508
      %1638 = vmatprep.subr.bf16.mxu0 %v1511
      %1639 = vmatpush1.bf16.msra.mxu0 %v1510
      %1640 = vmatprep.subr.bf16.mxu0 %v1513
      %1641 = vmatpush1.bf16.msra.mxu0 %v1512
      %1642 = vmatprep.subr.bf16.mxu0 %v1515
      %1643 = vmatpush1.bf16.msra.mxu0 %v1514
      %1644 = vmatprep.subr.bf16.mxu0 %v1517
      %1645 = vmatpush1.bf16.msra.mxu0 %v1516
      %1646 = vmatprep.subr.bf16.mxu0 %v1519
      %1647 = vmatpush1.bf16.msra.mxu0 %v1518
      %1648 = vmatprep.subr.bf16.mxu0 %v1521
      %1649 = vmatpush1.bf16.msra.mxu0 %v1520
      %1650 = vmatprep.subr.bf16.mxu0 %v1523
      %1651 = vmatpush1.bf16.msra.mxu0 %v1522
      %1652 = vmatprep.subr.bf16.mxu0 %v1525
      %1653 = vmatpush1.bf16.msra.mxu0 %v1524
      %1654 = vmatprep.subr.bf16.mxu0 %v1527
      %1655 = vmatpush1.bf16.msra.mxu0 %v1526
      %1656 = vmatprep.subr.bf16.mxu0 %v1529
      %1657 = vmatpush1.bf16.msra.mxu0 %v1528
      %1658 = vmatprep.subr.bf16.mxu0 %v1531
      %1659 = vmatpush1.bf16.msra.mxu0 %v1530
      %1660 = vmatprep.subr.bf16.mxu0 %v1533
      %1661 = vmatpush1.bf16.msra.mxu0 %v1532
      %1662 = vmatprep.subr.bf16.mxu0 %v1535
      %1663 = vmatpush1.bf16.msra.mxu0 %v1534
      %1664 = vmatprep.subr.bf16.mxu0 %v1537
      %1665 = vmatpush1.bf16.msra.mxu0 %v1536
      %1666 = vmatprep.mubr.bf16.mxu0 %v1207
      %1667 = vmatmul.mubr.bf16.gmra.mrb[0].mxu0 %v1206
      %v1668 = vpop.f32.mrb[0].mxu0
      %v1669 = vadd.f32 %v1307, %v1668
      %v1670 = vpop.f32.mrb[0].mxu0
      %v1671 = vadd.f32 %v1311, %v1670
      %v1672 = vpop.f32.mrb[0].mxu0
      %v1673 = vadd.f32 %v1307, %v1672
      %v1674 = vpop.f32.mrb[0].mxu0
      %v1675 = vadd.f32 %v1311, %v1674
      %1676 = vmatprep.mubr.bf16.mxu0 %v1211
      %1677 = vmatmul.mubr.bf16.gmra.mrb[0].mxu0 %v1210
      %v1678 = vpop.f32.mrb[0].mxu0
      %v1679 = vadd.f32 %v1307, %v1678
      %v1680 = vpop.f32.mrb[0].mxu0
      %v1681 = vadd.f32 %v1311, %v1680
      %v1682 = vpop.f32.mrb[0].mxu0
      %v1683 = vadd.f32 %v1307, %v1682
      %v1684 = vpop.f32.mrb[0].mxu0
      %v1685 = vadd.f32 %v1311, %v1684
      %1686 = vmatprep.mubr.bf16.mxu0 %v1215
      %1687 = vmatmul.mubr.bf16.gmra.mrb[0].mxu0 %v1214
      %v1688 = vpop.f32.mrb[0].mxu0
      %v1689 = vadd.f32 %v1307, %v1688
      %v1690 = vpop.f32.mrb[0].mxu0
      %v1691 = vadd.f32 %v1311, %v1690
      %v1692 = vpop.f32.mrb[0].mxu0
      %v1693 = vadd.f32 %v1307, %v1692
      %v1694 = vpop.f32.mrb[0].mxu0
      %v1695 = vadd.f32 %v1311, %v1694
      %1696 = vmatprep.mubr.bf16.mxu0 %v1219
      %1697 = vmatmul.mubr.bf16.gmra.mrb[0].mxu0 %v1218
      %v1698 = vpop.f32.mrb[0].mxu0
      %v1699 = vadd.f32 %v1307, %v1698
      %v1700 = vpop.f32.mrb[0].mxu0
      %v1701 = vadd.f32 %v1311, %v1700
      %v1702 = vpop.f32.mrb[0].mxu0
      %v1703 = vadd.f32 %v1307, %v1702
      %v1704 = vpop.f32.mrb[0].mxu0
      %v1705 = vadd.f32 %v1311, %v1704
      %1706 = vmatprep.mubr.bf16.mxu0 %v1223
      %1707 = vmatmul.mubr.bf16.gmra.mrb[0].mxu0 %v1222
      %v1708 = vpop.f32.mrb[0].mxu0
      %v1709 = vadd.f32 %v1307, %v1708
      %v1710 = vpop.f32.mrb[0].mxu0
      %v1711 = vadd.f32 %v1311, %v1710
      %v1712 = vpop.f32.mrb[0].mxu0
      %v1713 = vadd.f32 %v1307, %v1712
      %v1714 = vpop.f32.mrb[0].mxu0
      %v1715 = vadd.f32 %v1311, %v1714
      %1716 = vmatprep.mubr.bf16.mxu0 %v1227
      %1717 = vmatmul.mubr.bf16.gmra.mrb[0].mxu0 %v1226
      %v1718 = vpop.f32.mrb[0].mxu0
      %v1719 = vadd.f32 %v1307, %v1718
      %v1720 = vpop.f32.mrb[0].mxu0
      %v1721 = vadd.f32 %v1311, %v1720
      %v1722 = vpop.f32.mrb[0].mxu0
      %v1723 = vadd.f32 %v1307, %v1722
      %v1724 = vpop.f32.mrb[0].mxu0
      %v1725 = vadd.f32 %v1311, %v1724
      %1726 = vmatprep.mubr.bf16.mxu0 %v1231
      %1727 = vmatmul.mubr.bf16.gmra.mrb[0].mxu0 %v1230
      %v1728 = vpop.f32.mrb[0].mxu0
      %v1729 = vadd.f32 %v1307, %v1728
      %v1730 = vpop.f32.mrb[0].mxu0
      %v1731 = vadd.f32 %v1311, %v1730
      %v1732 = vpop.f32.mrb[0].mxu0
      %v1733 = vadd.f32 %v1307, %v1732
      %v1734 = vpop.f32.mrb[0].mxu0
      %v1735 = vadd.f32 %v1311, %v1734
      %1736 = vmatprep.mubr.bf16.mxu0 %v1235
      %1737 = vmatmul.mubr.bf16.gmra.mrb[0].mxu0 %v1234
      %v1738 = vpop.f32.mrb[0].mxu0
      %v1739 = vadd.f32 %v1307, %v1738
      %v1740 = vpop.f32.mrb[0].mxu0
      %v1741 = vadd.f32 %v1311, %v1740
      %v1742 = vpop.f32.mrb[0].mxu0
      %v1743 = vadd.f32 %v1307, %v1742
      %v1744 = vpop.f32.mrb[0].mxu0
      %v1745 = vadd.f32 %v1311, %v1744
      %1746 = vdwg.mxu0
      %1747 = vmatprep.subr.bf16.mxu0 %v1539
      %1748 = vmatpush1.bf16.msra.mxu0 %v1538
      %1749 = vmatprep.subr.bf16.mxu0 %v1541
      %1750 = vmatpush1.bf16.msra.mxu0 %v1540
      %1751 = vmatprep.subr.bf16.mxu0 %v1543
      %1752 = vmatpush1.bf16.msra.mxu0 %v1542
      %1753 = vmatprep.subr.bf16.mxu0 %v1545
      %1754 = vmatpush1.bf16.msra.mxu0 %v1544
      %1755 = vmatprep.subr.bf16.mxu0 %v1547
      %1756 = vmatpush1.bf16.msra.mxu0 %v1546
      %1757 = vmatprep.subr.bf16.mxu0 %v1549
      %1758 = vmatpush1.bf16.msra.mxu0 %v1548
      %1759 = vmatprep.subr.bf16.mxu0 %v1551
      %1760 = vmatpush1.bf16.msra.mxu0 %v1550
      %1761 = vmatprep.subr.bf16.mxu0 %v1553
      %1762 = vmatpush1.bf16.msra.mxu0 %v1552
      %1763 = vmatprep.subr.bf16.mxu0 %v1555
      %1764 = vmatpush1.bf16.msra.mxu0 %v1554
      %1765 = vmatprep.subr.bf16.mxu0 %v1557
      %1766 = vmatpush1.bf16.msra.mxu0 %v1556
      %1767 = vmatprep.subr.bf16.mxu0 %v1559
      %1768 = vmatpush1.bf16.msra.mxu0 %v1558
      %1769 = vmatprep.subr.bf16.mxu0 %v1561
      %1770 = vmatpush1.bf16.msra.mxu0 %v1560
      %1771 = vmatprep.subr.bf16.mxu0 %v1563
      %1772 = vmatpush1.bf16.msra.mxu0 %v1562
      %1773 = vmatprep.subr.bf16.mxu0 %v1565
      %1774 = vmatpush1.bf16.msra.mxu0 %v1564
      %1775 = vmatprep.subr.bf16.mxu0 %v1567
      %1776 = vmatpush1.bf16.msra.mxu0 %v1566
      %1777 = vmatprep.subr.bf16.mxu0 %v1569
      %1778 = vmatpush1.bf16.msra.mxu0 %v1568
      %1779 = vmatprep.mubr.bf16.mxu0 %v1209
      %1780 = vmatmul.mubr.bf16.gmra.mrb[0].mxu0 %v1208
      %v1781 = vpop.f32.mrb[0].mxu0
      %v1782 = vadd.f32 %v1669, %v1781
      %v1783 = vpop.f32.mrb[0].mxu0
      %v1784 = vadd.f32 %v1671, %v1783
      %v1785 = vpop.f32.mrb[0].mxu0
      %v1786 = vadd.f32 %v1673, %v1785
      %v1787 = vpop.f32.mrb[0].mxu0
      %v1788 = vadd.f32 %v1675, %v1787
      %1789 = vmatprep.mubr.bf16.mxu0 %v1213
      %1790 = vmatmul.mubr.bf16.gmra.mrb[0].mxu0 %v1212
      %v1791 = vpop.f32.mrb[0].mxu0
      %v1792 = vadd.f32 %v1679, %v1791
      %v1793 = vpop.f32.mrb[0].mxu0
      %v1794 = vadd.f32 %v1681, %v1793
      %v1795 = vpop.f32.mrb[0].mxu0
      %v1796 = vadd.f32 %v1683, %v1795
      %v1797 = vpop.f32.mrb[0].mxu0
      %v1798 = vadd.f32 %v1685, %v1797
      %1799 = vmatprep.mubr.bf16.mxu0 %v1217
      %1800 = vmatmul.mubr.bf16.gmra.mrb[0].mxu0 %v1216
      %v1801 = vpop.f32.mrb[0].mxu0
      %v1802 = vadd.f32 %v1689, %v1801
      %v1803 = vpop.f32.mrb[0].mxu0
      %v1804 = vadd.f32 %v1691, %v1803
      %v1805 = vpop.f32.mrb[0].mxu0
      %v1806 = vadd.f32 %v1693, %v1805
      %v1807 = vpop.f32.mrb[0].mxu0
      %v1808 = vadd.f32 %v1695, %v1807
      %1809 = vmatprep.mubr.bf16.mxu0 %v1221
      %1810 = vmatmul.mubr.bf16.gmra.mrb[0].mxu0 %v1220
      %v1811 = vpop.f32.mrb[0].mxu0
      %v1812 = vadd.f32 %v1699, %v1811
      %v1813 = vpop.f32.mrb[0].mxu0
      %v1814 = vadd.f32 %v1701, %v1813
      %v1815 = vpop.f32.mrb[0].mxu0
      %v1816 = vadd.f32 %v1703, %v1815
      %v1817 = vpop.f32.mrb[0].mxu0
      %v1818 = vadd.f32 %v1705, %v1817
      %1819 = vmatprep.mubr.bf16.mxu0 %v1225
      %1820 = vmatmul.mubr.bf16.gmra.mrb[0].mxu0 %v1224
      %v1821 = vpop.f32.mrb[0].mxu0
      %v1822 = vadd.f32 %v1709, %v1821
      %v1823 = vpop.f32.mrb[0].mxu0
      %v1824 = vadd.f32 %v1711, %v1823
      %v1825 = vpop.f32.mrb[0].mxu0
      %v1826 = vadd.f32 %v1713, %v1825
      %v1827 = vpop.f32.mrb[0].mxu0
      %v1828 = vadd.f32 %v1715, %v1827
      %1829 = vmatprep.mubr.bf16.mxu0 %v1229
      %1830 = vmatmul.mubr.bf16.gmra.mrb[0].mxu0 %v1228
      %v1831 = vpop.f32.mrb[0].mxu0
      %v1832 = vadd.f32 %v1719, %v1831
      %v1833 = vpop.f32.mrb[0].mxu0
      %v1834 = vadd.f32 %v1721, %v1833
      %v1835 = vpop.f32.mrb[0].mxu0
      %v1836 = vadd.f32 %v1723, %v1835
      %v1837 = vpop.f32.mrb[0].mxu0
      %v1838 = vadd.f32 %v1725, %v1837
      %1839 = vmatprep.mubr.bf16.mxu0 %v1233
      %1840 = vmatmul.mubr.bf16.gmra.mrb[0].mxu0 %v1232
      %v1841 = vpop.f32.mrb[0].mxu0
      %v1842 = vadd.f32 %v1729, %v1841
      %v1843 = vpop.f32.mrb[0].mxu0
      %v1844 = vadd.f32 %v1731, %v1843
      %v1845 = vpop.f32.mrb[0].mxu0
      %v1846 = vadd.f32 %v1733, %v1845
      %v1847 = vpop.f32.mrb[0].mxu0
      %v1848 = vadd.f32 %v1735, %v1847
      %1849 = vmatprep.mubr.bf16.mxu0 %v1237
      %1850 = vmatmul.mubr.bf16.gmra.mrb[0].mxu0 %v1236
      %v1851 = vpop.f32.mrb[0].mxu0
      %v1852 = vadd.f32 %v1739, %v1851
      %v1853 = vpop.f32.mrb[0].mxu0
      %v1854 = vadd.f32 %v1741, %v1853
      %v1855 = vpop.f32.mrb[0].mxu0
      %v1856 = vadd.f32 %v1743, %v1855
      %v1857 = vpop.f32.mrb[0].mxu0
      %v1858 = vadd.f32 %v1745, %v1857
      %1859 = vdwg.mxu0
      %vm1860 = vcmp.ge.f32.partialorder %v1782, 0.0
      %vm1861 = vcmp.ge.f32.partialorder %v1784, 0.0
      %vm1862 = vcmp.ge.f32.partialorder %v1786, 0.0
      %vm1863 = vcmp.ge.f32.partialorder %v1788, 0.0
      %vm1864 = vcmp.ge.f32.partialorder %v1792, 0.0
      %vm1865 = vcmp.ge.f32.partialorder %v1794, 0.0
      %vm1866 = vcmp.ge.f32.partialorder %v1796, 0.0
      %vm1867 = vcmp.ge.f32.partialorder %v1798, 0.0
      %vm1868 = vcmp.ge.f32.partialorder %v1802, 0.0
      %vm1869 = vcmp.ge.f32.partialorder %v1804, 0.0
      %vm1870 = vcmp.ge.f32.partialorder %v1806, 0.0
      %vm1871 = vcmp.ge.f32.partialorder %v1808, 0.0
      %vm1872 = vcmp.ge.f32.partialorder %v1812, 0.0
      %vm1873 = vcmp.ge.f32.partialorder %v1814, 0.0
      %vm1874 = vcmp.ge.f32.partialorder %v1816, 0.0
      %vm1875 = vcmp.ge.f32.partialorder %v1818, 0.0
      %vm1876 = vcmp.ge.f32.partialorder %v1822, 0.0
      %vm1877 = vcmp.ge.f32.partialorder %v1824, 0.0
      %vm1878 = vcmp.ge.f32.partialorder %v1826, 0.0
      %vm1879 = vcmp.ge.f32.partialorder %v1828, 0.0
      %vm1880 = vcmp.ge.f32.partialorder %v1832, 0.0
      %vm1881 = vcmp.ge.f32.partialorder %v1834, 0.0
      %vm1882 = vcmp.ge.f32.partialorder %v1836, 0.0
      %vm1883 = vcmp.ge.f32.partialorder %v1838, 0.0
      %vm1884 = vcmp.ge.f32.partialorder %v1842, 0.0
      %vm1885 = vcmp.ge.f32.partialorder %v1844, 0.0
      %vm1886 = vcmp.ge.f32.partialorder %v1846, 0.0
      %vm1887 = vcmp.ge.f32.partialorder %v1848, 0.0
      %vm1888 = vcmp.ge.f32.partialorder %v1852, 0.0
      %vm1889 = vcmp.ge.f32.partialorder %v1854, 0.0
      %vm1890 = vcmp.ge.f32.partialorder %v1856, 0.0
      %vm1891 = vcmp.ge.f32.partialorder %v1858, 0.0
      %v1892 = vmul.f32 %v1782, 0.2
      %v1893 = vmul.f32 %v1784, 0.2
      %v1894 = vmul.f32 %v1786, 0.2
      %v1895 = vmul.f32 %v1788, 0.2
      %v1896 = vmul.f32 %v1792, 0.2
      %v1897 = vmul.f32 %v1794, 0.2
      %v1898 = vmul.f32 %v1796, 0.2
      %v1899 = vmul.f32 %v1798, 0.2
      %v1900 = vmul.f32 %v1802, 0.2
      %v1901 = vmul.f32 %v1804, 0.2
      %v1902 = vmul.f32 %v1806, 0.2
      %v1903 = vmul.f32 %v1808, 0.2
      %v1904 = vmul.f32 %v1812, 0.2
      %v1905 = vmul.f32 %v1814, 0.2
      %v1906 = vmul.f32 %v1816, 0.2
      %v1907 = vmul.f32 %v1818, 0.2
      %v1908 = vmul.f32 %v1822, 0.2
      %v1909 = vmul.f32 %v1824, 0.2
      %v1910 = vmul.f32 %v1826, 0.2
      %v1911 = vmul.f32 %v1828, 0.2
      %v1912 = vmul.f32 %v1832, 0.2
      %v1913 = vmul.f32 %v1834, 0.2
      %v1914 = vmul.f32 %v1836, 0.2
      %v1915 = vmul.f32 %v1838, 0.2
      %v1916 = vmul.f32 %v1842, 0.2
      %v1917 = vmul.f32 %v1844, 0.2
      %v1918 = vmul.f32 %v1846, 0.2
      %v1919 = vmul.f32 %v1848, 0.2
      %v1920 = vmul.f32 %v1852, 0.2
      %v1921 = vmul.f32 %v1854, 0.2
      %v1922 = vmul.f32 %v1856, 0.2
      %v1923 = vmul.f32 %v1858, 0.2
      %v1924 = vsel %vm1860, %v1782, %v1892
      %v1925 = vsel %vm1861, %v1784, %v1893
      %v1926 = vsel %vm1862, %v1786, %v1894
      %v1927 = vsel %vm1863, %v1788, %v1895
      %v1928 = vsel %vm1864, %v1792, %v1896
      %v1929 = vsel %vm1865, %v1794, %v1897
      %v1930 = vsel %vm1866, %v1796, %v1898
      %v1931 = vsel %vm1867, %v1798, %v1899
      %v1932 = vsel %vm1868, %v1802, %v1900
      %v1933 = vsel %vm1869, %v1804, %v1901
      %v1934 = vsel %vm1870, %v1806, %v1902
      %v1935 = vsel %vm1871, %v1808, %v1903
      %v1936 = vsel %vm1872, %v1812, %v1904
      %v1937 = vsel %vm1873, %v1814, %v1905
      %v1938 = vsel %vm1874, %v1816, %v1906
      %v1939 = vsel %vm1875, %v1818, %v1907
      %v1940 = vsel %vm1876, %v1822, %v1908
      %v1941 = vsel %vm1877, %v1824, %v1909
      %v1942 = vsel %vm1878, %v1826, %v1910
      %v1943 = vsel %vm1879, %v1828, %v1911
      %v1944 = vsel %vm1880, %v1832, %v1912
      %v1945 = vsel %vm1881, %v1834, %v1913
      %v1946 = vsel %vm1882, %v1836, %v1914
      %v1947 = vsel %vm1883, %v1838, %v1915
      %v1948 = vsel %vm1884, %v1842, %v1916
      %v1949 = vsel %vm1885, %v1844, %v1917
      %v1950 = vsel %vm1886, %v1846, %v1918
      %v1951 = vsel %vm1887, %v1848, %v1919
      %v1952 = vsel %vm1888, %v1852, %v1920
      %v1953 = vsel %vm1889, %v1854, %v1921
      %v1954 = vsel %vm1890, %v1856, %v1922
      %v1955 = vsel %vm1891, %v1858, %v1923
      %v1956 = vpack.c.bf16 %v1926, %v1924
      %v1957 = vpack.c.bf16 %v1927, %v1925
      %v1958 = vpack.c.bf16 %v1930, %v1928
      %v1959 = vpack.c.bf16 %v1931, %v1929
      %v1960 = vpack.c.bf16 %v1934, %v1932
      %v1961 = vpack.c.bf16 %v1935, %v1933
      %v1962 = vpack.c.bf16 %v1938, %v1936
      %v1963 = vpack.c.bf16 %v1939, %v1937
      %v1964 = vpack.c.bf16 %v1942, %v1940
      %v1965 = vpack.c.bf16 %v1943, %v1941
      %v1966 = vpack.c.bf16 %v1946, %v1944
      %v1967 = vpack.c.bf16 %v1947, %v1945
      %v1968 = vpack.c.bf16 %v1950, %v1948
      %v1969 = vpack.c.bf16 %v1951, %v1949
      %v1970 = vpack.c.bf16 %v1954, %v1952
      %v1971 = vpack.c.bf16 %v1955, %v1953
      %v1972 = vld [vmem:[%s5] sm:$0xf]
      %v1973 = vld [vmem:[%s5 + $0x4] sm:$0xf]
      %v1974 = vld [vmem:[%s5 + $0x8] sm:$0xf]
      %v1975 = vld [vmem:[%s5 + $0xc] sm:$0xf]
      %v1976 = vld [vmem:[%s5 + $0x10] sm:$0xf]
      %v1977 = vld [vmem:[%s5 + $0x14] sm:$0xf]
      %v1978 = vld [vmem:[%s5 + $0x18] sm:$0xf]
      %v1979 = vld [vmem:[%s5 + $0x1c] sm:$0xf]
      %v1980 = vld [vmem:[%s5 + $0x20] sm:$0xf]
      %v1981 = vld [vmem:[%s5 + $0x24] sm:$0xf]
      %v1982 = vld [vmem:[%s5 + $0x28] sm:$0xf]
      %v1983 = vld [vmem:[%s5 + $0x2c] sm:$0xf]
      %v1984 = vld [vmem:[%s5 + $0x30] sm:$0xf]
      %v1985 = vld [vmem:[%s5 + $0x34] sm:$0xf]
      %v1986 = vld [vmem:[%s5 + $0x38] sm:$0xf]
      %v1987 = vld [vmem:[%s5 + $0x3c] sm:$0xf]
      %v1988 = vld [vmem:[%s5 + $0x40] sm:$0xf]
      %v1989 = vld [vmem:[%s5 + $0x44] sm:$0xf]
      %v1990 = vld [vmem:[%s5 + $0x48] sm:$0xf]
      %v1991 = vld [vmem:[%s5 + $0x4c] sm:$0xf]
      %v1992 = vld [vmem:[%s5 + $0x50] sm:$0xf]
      %v1993 = vld [vmem:[%s5 + $0x54] sm:$0xf]
      %v1994 = vld [vmem:[%s5 + $0x58] sm:$0xf]
      %v1995 = vld [vmem:[%s5 + $0x5c] sm:$0xf]
      %v1996 = vld [vmem:[%s5 + $0x60] sm:$0xf]
      %v1997 = vld [vmem:[%s5 + $0x64] sm:$0xf]
      %v1998 = vld [vmem:[%s5 + $0x68] sm:$0xf]
      %v1999 = vld [vmem:[%s5 + $0x6c] sm:$0xf]
      %v2000 = vld [vmem:[%s5 + $0x70] sm:$0xf]
      %v2001 = vld [vmem:[%s5 + $0x74] sm:$0xf]
      %v2002 = vld [vmem:[%s5 + $0x78] sm:$0xf]
      %v2003 = vld [vmem:[%s5 + $0x7c] sm:$0xf]
      %v2004 = vld [vmem:[%s6] sm:$0x1]
      %v2006 = vlaneseq
      %v2007 = vshrl.u32 %v2006, 7
      %v2008 = vsub.s32 0, %v2007
      %v2009 = vrot.slane %v2004, %v2008
      %v2043 = vunpack.c.l.b16 %v1972
      %v2044 = vunpack.c.l.b16 %v1973
      %v2045 = vunpack.c.l.b16 %v1974
      %v2046 = vunpack.c.l.b16 %v1975
      %v2047 = vunpack.c.l.b16 %v1976
      %v2048 = vunpack.c.l.b16 %v1977
      %v2049 = vunpack.c.l.b16 %v1978
      %v2050 = vunpack.c.l.b16 %v1979
      %v2051 = vunpack.c.l.b16 %v1980
      %v2052 = vunpack.c.l.b16 %v1981
      %v2053 = vunpack.c.l.b16 %v1982
      %v2054 = vunpack.c.l.b16 %v1983
      %v2055 = vunpack.c.l.b16 %v1984
      %v2056 = vunpack.c.l.b16 %v1985
      %v2057 = vunpack.c.l.b16 %v1986
      %v2058 = vunpack.c.l.b16 %v1987
      %v2059 = vunpack.c.l.b16 %v1988
      %v2060 = vunpack.c.l.b16 %v1989
      %v2061 = vunpack.c.l.b16 %v1990
      %v2062 = vunpack.c.l.b16 %v1991
      %v2063 = vunpack.c.l.b16 %v1992
      %v2064 = vunpack.c.l.b16 %v1993
      %v2065 = vunpack.c.l.b16 %v1994
      %v2066 = vunpack.c.l.b16 %v1995
      %v2067 = vunpack.c.l.b16 %v1996
      %v2068 = vunpack.c.l.b16 %v1997
      %v2069 = vunpack.c.l.b16 %v1998
      %v2070 = vunpack.c.l.b16 %v1999
      %v2071 = vunpack.c.l.b16 %v2000
      %v2072 = vunpack.c.l.b16 %v2001
      %v2073 = vunpack.c.l.b16 %v2002
      %v2074 = vunpack.c.l.b16 %v2003
      %v2075 = vpack.c.b16 %v2044, %v2043
      %v2076 = vpack.c.b16 %v2046, %v2045
      %v2077 = vpack.c.b16 %v2048, %v2047
      %v2078 = vpack.c.b16 %v2050, %v2049
      %v2079 = vpack.c.b16 %v2052, %v2051
      %v2080 = vpack.c.b16 %v2054, %v2053
      %v2081 = vpack.c.b16 %v2056, %v2055
      %v2082 = vpack.c.b16 %v2058, %v2057
      %v2083 = vpack.c.b16 %v2060, %v2059
      %v2084 = vpack.c.b16 %v2062, %v2061
      %v2085 = vpack.c.b16 %v2064, %v2063
      %v2086 = vpack.c.b16 %v2066, %v2065
      %v2087 = vpack.c.b16 %v2068, %v2067
      %v2088 = vpack.c.b16 %v2070, %v2069
      %v2089 = vpack.c.b16 %v2072, %v2071
      %v2090 = vpack.c.b16 %v2074, %v2073
      %2107 = vmatprep.subr.bf16.mxu0 0
      %2108 = vmatpush1.bf16.msra.mxu0 %v2075
      %2109 = vmatprep.subr.bf16.mxu0 0
      %2110 = vmatpush1.bf16.msra.mxu0 %v2076
      %2111 = vmatprep.subr.bf16.mxu0 0
      %2112 = vmatpush1.bf16.msra.mxu0 %v2077
      %2113 = vmatprep.subr.bf16.mxu0 0
      %2114 = vmatpush1.bf16.msra.mxu0 %v2078
      %2115 = vmatprep.subr.bf16.mxu0 0
      %2116 = vmatpush1.bf16.msra.mxu0 %v2079
      %2117 = vmatprep.subr.bf16.mxu0 0
      %2118 = vmatpush1.bf16.msra.mxu0 %v2080
      %2119 = vmatprep.subr.bf16.mxu0 0
      %2120 = vmatpush1.bf16.msra.mxu0 %v2081
      %2121 = vmatprep.subr.bf16.mxu0 0
      %2122 = vmatpush1.bf16.msra.mxu0 %v2082
      %2123 = vmatprep.subr.bf16.mxu0 0
      %2124 = vmatpush1.bf16.msra.mxu0 %v2083
      %2125 = vmatprep.subr.bf16.mxu0 0
      %2126 = vmatpush1.bf16.msra.mxu0 %v2084
      %2127 = vmatprep.subr.bf16.mxu0 0
      %2128 = vmatpush1.bf16.msra.mxu0 %v2085
      %2129 = vmatprep.subr.bf16.mxu0 0
      %2130 = vmatpush1.bf16.msra.mxu0 %v2086
      %2131 = vmatprep.subr.bf16.mxu0 0
      %2132 = vmatpush1.bf16.msra.mxu0 %v2087
      %2133 = vmatprep.subr.bf16.mxu0 0
      %2134 = vmatpush1.bf16.msra.mxu0 %v2088
      %2135 = vmatprep.subr.bf16.mxu0 0
      %2136 = vmatpush1.bf16.msra.mxu0 %v2089
      %2137 = vmatprep.subr.bf16.mxu0 0
      %2138 = vmatpush1.bf16.msra.mxu0 %v2090
      %2139 = vmatprep.mubr.bf16.mxu0 %v1957
      %2140 = vmatmul.mubr.bf16.gmra.mrb[0].mxu0 %v1956
      %v2141 = vpop.f32.mrb[0].mxu0
      %v2142 = vadd.f32 %v2009, %v2141
      %v2143 = vpop.f32.mrb[0].mxu0
      %v2144 = vpop.f32.mrb[0].mxu0
      %v2145 = vadd.f32 %v2009, %v2144
      %v2146 = vpop.f32.mrb[0].mxu0
      %2147 = vmatprep.mubr.bf16.mxu0 %v1959
      %2148 = vmatmul.mubr.bf16.gmra.mrb[0].mxu0 %v1958
      %v2149 = vpop.f32.mrb[0].mxu0
      %v2150 = vadd.f32 %v2009, %v2149
      %v2151 = vpop.f32.mrb[0].mxu0
      %v2152 = vpop.f32.mrb[0].mxu0
      %v2153 = vadd.f32 %v2009, %v2152
      %v2154 = vpop.f32.mrb[0].mxu0
      %2155 = vmatprep.mubr.bf16.mxu0 %v1961
      %2156 = vmatmul.mubr.bf16.gmra.mrb[0].mxu0 %v1960
      %v2157 = vpop.f32.mrb[0].mxu0
      %v2158 = vadd.f32 %v2009, %v2157
      %v2159 = vpop.f32.mrb[0].mxu0
      %v2160 = vpop.f32.mrb[0].mxu0
      %v2161 = vadd.f32 %v2009, %v2160
      %v2162 = vpop.f32.mrb[0].mxu0
      %2163 = vmatprep.mubr.bf16.mxu0 %v1963
      %2164 = vmatmul.mubr.bf16.gmra.mrb[0].mxu0 %v1962
      %v2165 = vpop.f32.mrb[0].mxu0
      %v2166 = vadd.f32 %v2009, %v2165
      %v2167 = vpop.f32.mrb[0].mxu0
      %v2168 = vpop.f32.mrb[0].mxu0
      %v2169 = vadd.f32 %v2009, %v2168
      %v2170 = vpop.f32.mrb[0].mxu0
      %2171 = vmatprep.mubr.bf16.mxu0 %v1965
      %2172 = vmatmul.mubr.bf16.gmra.mrb[0].mxu0 %v1964
      %v2173 = vpop.f32.mrb[0].mxu0
      %v2174 = vadd.f32 %v2009, %v2173
      %v2175 = vpop.f32.mrb[0].mxu0
      %v2176 = vpop.f32.mrb[0].mxu0
      %v2177 = vadd.f32 %v2009, %v2176
      %v2178 = vpop.f32.mrb[0].mxu0
      %2179 = vmatprep.mubr.bf16.mxu0 %v1967
      %2180 = vmatmul.mubr.bf16.gmra.mrb[0].mxu0 %v1966
      %v2181 = vpop.f32.mrb[0].mxu0
      %v2182 = vadd.f32 %v2009, %v2181
      %v2183 = vpop.f32.mrb[0].mxu0
      %v2184 = vpop.f32.mrb[0].mxu0
      %v2185 = vadd.f32 %v2009, %v2184
      %v2186 = vpop.f32.mrb[0].mxu0
      %2187 = vmatprep.mubr.bf16.mxu0 %v1969
      %2188 = vmatmul.mubr.bf16.gmra.mrb[0].mxu0 %v1968
      %v2189 = vpop.f32.mrb[0].mxu0
      %v2190 = vadd.f32 %v2009, %v2189
      %v2191 = vpop.f32.mrb[0].mxu0
      %v2192 = vpop.f32.mrb[0].mxu0
      %v2193 = vadd.f32 %v2009, %v2192
      %v2194 = vpop.f32.mrb[0].mxu0
      %2195 = vmatprep.mubr.bf16.mxu0 %v1971
      %2196 = vmatmul.mubr.bf16.gmra.mrb[0].mxu0 %v1970
      %v2197 = vpop.f32.mrb[0].mxu0
      %v2198 = vadd.f32 %v2009, %v2197
      %v2199 = vpop.f32.mrb[0].mxu0
      %v2200 = vpop.f32.mrb[0].mxu0
      %v2201 = vadd.f32 %v2009, %v2200
      %v2202 = vpop.f32.mrb[0].mxu0
      %2203 = vdwg.mxu0
      %v2204 = vpack.c.bf16 %v2145, %v2142
      %v2205 = vpack.c.bf16 %v2153, %v2150
      %v2206 = vpack.c.bf16 %v2161, %v2158
      %v2207 = vpack.c.bf16 %v2169, %v2166
      %v2208 = vpack.c.bf16 %v2177, %v2174
      %v2209 = vpack.c.bf16 %v2185, %v2182
      %v2210 = vpack.c.bf16 %v2193, %v2190
      %v2211 = vpack.c.bf16 %v2201, %v2198
      %v2220 = vunpack.c.l.b16 %v2204
      %v2221 = vunpack.c.h.b16 %v2204
      %v2222 = vunpack.c.l.b16 %v2205
      %v2223 = vunpack.c.h.b16 %v2205
      %v2224 = vunpack.c.l.b16 %v2206
      %v2225 = vunpack.c.h.b16 %v2206
      %v2226 = vunpack.c.l.b16 %v2207
      %v2227 = vunpack.c.h.b16 %v2207
      %v2228 = vunpack.c.l.b16 %v2208
      %v2229 = vunpack.c.h.b16 %v2208
      %v2230 = vunpack.c.l.b16 %v2209
      %v2231 = vunpack.c.h.b16 %v2209
      %v2232 = vunpack.c.l.b16 %v2210
      %v2233 = vunpack.c.h.b16 %v2210
      %v2234 = vunpack.c.l.b16 %v2211
      %v2235 = vunpack.c.h.b16 %v2211
      %v2236 = vpack.c.b16 %v2220, %v2220
      %v2237 = vpack.c.b16 %v2221, %v2221
      %v2238 = vpack.c.b16 %v2222, %v2222
      %v2239 = vpack.c.b16 %v2223, %v2223
      %v2240 = vpack.c.b16 %v2224, %v2224
      %v2241 = vpack.c.b16 %v2225, %v2225
      %v2242 = vpack.c.b16 %v2226, %v2226
      %v2243 = vpack.c.b16 %v2227, %v2227
      %v2244 = vpack.c.b16 %v2228, %v2228
      %v2245 = vpack.c.b16 %v2229, %v2229
      %v2246 = vpack.c.b16 %v2230, %v2230
      %v2247 = vpack.c.b16 %v2231, %v2231
      %v2248 = vpack.c.b16 %v2232, %v2232
      %v2249 = vpack.c.b16 %v2233, %v2233
      %v2250 = vpack.c.b16 %v2234, %v2234
      %v2251 = vpack.c.b16 %v2235, %v2235
      %2268 = vst [vmem:[%s283] sm:$0xf] %v2236
      %2269 = vst [vmem:[%s283 + $0x4] sm:$0xf] %v2237
      %2270 = vst [vmem:[%s283 + $0x8] sm:$0xf] %v2238
      %2271 = vst [vmem:[%s283 + $0xc] sm:$0xf] %v2239
      %2272 = vst [vmem:[%s283 + $0x10] sm:$0xf] %v2240
      %2273 = vst [vmem:[%s283 + $0x14] sm:$0xf] %v2241
      %2274 = vst [vmem:[%s283 + $0x18] sm:$0xf] %v2242
      %2275 = vst [vmem:[%s283 + $0x1c] sm:$0xf] %v2243
      %2276 = vst [vmem:[%s283 + $0x20] sm:$0xf] %v2244
      %2277 = vst [vmem:[%s283 + $0x24] sm:$0xf] %v2245
      %2278 = vst [vmem:[%s283 + $0x28] sm:$0xf] %v2246
      %2279 = vst [vmem:[%s283 + $0x2c] sm:$0xf] %v2247
      %2280 = vst [vmem:[%s283 + $0x30] sm:$0xf] %v2248
      %2281 = vst [vmem:[%s283 + $0x34] sm:$0xf] %v2249
      %2282 = vst [vmem:[%s283 + $0x38] sm:$0xf] %v2250
      %2283 = vst [vmem:[%s283 + $0x3c] sm:$0xf] %v2251
      %s2284 = smul.u32 16, %s18
      %p2285 = scmp.lt.s32.totalorder %s2284, 31
      %s2286 = scalar_select %p2285, %s2284, 31
      %s2287 = smul.addr %s2286, 4
      %s2288 = scalar_lea.vmem %s7, %s2287
      // Predicated region
      $region49: #{discriminator_forward.1} parent=47 // pred_check
        %p2289 = pneg %p188
      $region50: #{discriminator_forward.1} parent=47 // pred_check_branch
        %2291 = sbr.rel (%p2289) target = $region52
      $region51: #{discriminator_forward.1} parent=47 // pred_region
        %s2292 = smul.u32 16, %s18
      $region52: #{discriminator_forward.1} parent=47 // pred_fallthru
        _
    $region48: #{discriminator_forward.1} parent=5 // pred_fallthru
      _
    %p2293 = scmp.le.s32.totalorder 2, %s13
    // Predicated region
    $region53: #{discriminator_forward.1} parent=5 // pred_check
      %p2294 = pneg %p2293
    $region54: #{discriminator_forward.1} parent=5 // pred_check_branch
      %2296 = sbr.rel (%p2294) target = $region56
    $region55: #{discriminator_forward.1} parent=5 // pred_region
      %s2297 = ssub.s32 %s13, 2
      // Predicated region
      $region57: #{discriminator_forward.1} parent=55 // pred_check
        %p2298 = pneg %p194
      $region58: #{discriminator_forward.1} parent=55 // pred_check_branch
        %2300 = sbr.rel (%p2298) target = $region60
      $region59: #{discriminator_forward.1} parent=55 // pred_region
        %s2301 = smul.u32 16, %s19
        %p2302 = scmp.lt.s32.totalorder %s2301, 31
        %s2303 = scalar_select %p2302, %s2301, 31
        %s2304 = smul.addr %s2303, 4
        %s2305 = scalar_lea.vmem %s7, %s2304
      $region60: #{discriminator_forward.1} parent=55 // pred_fallthru
        _
    $region56: #{discriminator_forward.1} parent=5 // pred_fallthru
      _
  $region6: #{discriminator_forward.1} parent=0 // loop_footer
    %s17 = sadd.s32 1, %s13
  $region7: #{discriminator_forward.1} parent=0 // loop_footer_branch
    %12 = sbr.rel target = $region3
  $region8: #{discriminator_forward.1} parent=0 // loop_exit
    _

</llo_original>
